<compile_context>
chip_gen: v7x
topology: tpu7x:2x2x1
jax: 0.10.0
libtpu: 0.0.40
codegen_flags: <defaults>
</compile_context>

<pallas_src>
import functools

import jax
import jax.numpy as jnp
from jax.experimental import pallas as pl
from jax.experimental.pallas import tpu as pltpu


def _round_up(x, m):
    return (x + m - 1) // m * m


def _make_kernel(num_head, attn_dim):
    def kernel(ik_ref, sc_ref, wvt_hbm, bv_ref, wot_hbm, bo_ref, out_ref,
               wvt_vmem, wot_vmem, v_scr, attn_scr, dma_sem):
        # ik_ref  : (1, S, isize)    VMEM block (q-invariant -> fetched once/batch)
        # sc_ref  : (1, H, tq, S)    VMEM block
        # wvt_hbm : (isize, hsize)   ANY/HBM ref, pre-transposed v_adaptor weight
        # bv_ref  : (1, hsize)       f32
        # wot_hbm : (hsize, osize_p) ANY/HBM ref, pre-transposed (lane-padded) outer weight
        # bo_ref  : (1, osize_p)     f32
        # out_ref : (1, tq, osize_p)
        # wvt_vmem / wot_vmem : single-buffered VMEM weight copies
        # v_scr   : (S, hsize)       V projection, valid for all q tiles of a batch
        # attn_scr: (tq, hsize)      per-head results, consumed by one output GEMM

        # --- once per batch: single-buffered weight DMAs + V projection ------
        @pl.when(pl.program_id(1) == 0)
        def _():
            cp_wv = pltpu.make_async_copy(wvt_hbm, wvt_vmem, dma_sem.at[0])
            cp_wo = pltpu.make_async_copy(wot_hbm, wot_vmem, dma_sem.at[1])
            cp_wv.start()
            cp_wo.start()
            cp_wv.wait()
            v = jnp.dot(ik_ref[0], wvt_vmem[...],
                        preferred_element_type=jnp.float32) + bv_ref[...]
            v_scr[...] = v.astype(v_scr.dtype)
            cp_wo.wait()          # wot DMA overlaps the V-projection GEMM

        # --- per q tile: per-head contraction straight into the attn scratch -
        # (ref slices only -> addressed VMEM loads/stores, no vreg relayout)
        for h in range(num_head):
            lo = h * attn_dim
            ah = jnp.dot(sc_ref[0, h], v_scr[:, lo:lo + attn_dim],
                         preferred_element_type=jnp.float32)        # (tq, adim)
            attn_scr[:, lo:lo + attn_dim] = ah.astype(attn_scr.dtype)

        # --- one K=hsize output GEMM (+bias), lane-dense store ---------------
        out = jnp.dot(attn_scr[...], wot_vmem[...],
                      preferred_element_type=jnp.float32) + bo_ref[...]
        out_ref[0] = out.astype(out_ref.dtype)

    return kernel


def taught_cross_attn(iK, scores, wv, bv, wo, bo, num_head, *,
                      q_tile=128, out_dtype=None,
                      vmem_budget_bytes=48 * 2**20, vmem_limit_bytes=None):
    """iK: (B,S,isize), scores: (B,H,Q,S); wv/wo in PyTorch Linear layout
    (out_features, in_features); bv/bo biases.  Returns (B, Q, osize).
    Call under jax.jit so the padded/transposed weights fold into constants."""
    B, S, isize = iK.shape
    _, H, Q, S2 = scores.shape
    hsize = wv.shape[0]
    osize = wo.shape[0]
    attn_dim = hsize // num_head
    assert H == num_head and S2 == S and attn_dim * num_head == hsize
    assert wv.shape == (hsize, isize) and wo.shape == (osize, hsize)

    # bf16 models: run the contractions in bf16 (f32 accumulation); f32 stays f32.
    cdt = jnp.bfloat16 if (iK.dtype == jnp.bfloat16
                           or scores.dtype == jnp.bfloat16) else jnp.float32
    out_dtype = iK.dtype if out_dtype is None else out_dtype

    # Lane-dense output: pad osize to a multiple of 128 only when needed.
    osize_p = _round_up(osize, 128)

    cds = jnp.dtype(cdt).itemsize
    ods = jnp.dtype(out_dtype).itemsize

    def vmem_bytes(tq):
        return (2 * S * isize * cds                     # iK blocks (double buffered)
                + 2 * H * tq * S * cds                  # scores blocks
                + 2 * (hsize + osize_p) * 4             # bias blocks (f32)
                + 2 * tq * osize_p * ods                # output blocks
                + (isize * hsize + hsize * osize_p) * cds   # weight scratch (single)
                + S * hsize * cds                       # V scratch
                + tq * hsize * cds)                     # attn scratch

    # Q tiling: full Q when small, otherwise 128-wide tiles, shrunk until the
    # VMEM estimate fits the budget (v7x-safe default).
    tq = Q if Q <= q_tile else q_tile
    if tq != Q:
        tq = max(8, (tq // 8) * 8)
    while tq > 8 and vmem_bytes(tq) > vmem_budget_bytes:
        tq = max(8, (tq // 2) // 8 * 8)
    num_q = pl.cdiv(Q, tq)
    Q_p = num_q * tq

    # Layout prep (hoisted out of the kernel; constant-folds under jit).
    iK_c = iK.astype(cdt)
    scores_c = scores.astype(cdt)
    if Q_p != Q:
        scores_c = jnp.pad(scores_c, ((0, 0), (0, 0), (0, Q_p - Q), (0, 0)))
    wvt = jnp.asarray(wv).T.astype(cdt)                      # (isize, hsize)
    wot = jnp.asarray(wo).T.astype(cdt)                      # (hsize, osize)
    if osize_p != osize:
        wot = jnp.pad(wot, ((0, 0), (0, osize_p - osize)))
    bv2 = jnp.asarray(bv).astype(jnp.float32).reshape(1, hsize)
    bo2 = jnp.asarray(bo).astype(jnp.float32)
    if osize_p != osize:
        bo2 = jnp.pad(bo2, (0, osize_p - osize))
    bo2 = bo2.reshape(1, osize_p)

    grid_spec = pltpu.PrefetchScalarGridSpec(
        num_scalar_prefetch=0,
        grid=(B, num_q),
        in_specs=[
            pl.BlockSpec((1, S, isize), lambda b, q: (b, 0, 0)),     # iK
            pl.BlockSpec((1, H, tq, S), lambda b, q: (b, 0, q, 0)),  # scores
            pl.BlockSpec(memory_space=pl.ANY),                       # wvt (HBM)
            pl.BlockSpec((1, hsize), lambda b, q: (0, 0)),           # bv
            pl.BlockSpec(memory_space=pl.ANY),                       # wot (HBM)
            pl.BlockSpec((1, osize_p), lambda b, q: (0, 0)),         # bo
        ],
        out_specs=pl.BlockSpec((1, tq, osize_p), lambda b, q: (b, q, 0)),
        scratch_shapes=[
            pltpu.VMEM((isize, hsize), cdt),      # single-buffered wvt
            pltpu.VMEM((hsize, osize_p), cdt),    # single-buffered wot
            pltpu.VMEM((S, hsize), cdt),          # V (valid per batch)
            pltpu.VMEM((tq, hsize), cdt),         # per-tile attn
            pltpu.SemaphoreType.DMA((2,)),
        ],
    )

    est = vmem_bytes(tq)
    if vmem_limit_bytes is None and est > 24 * 2**20:
        vmem_limit_bytes = min(int(2 * est) + (2 << 20), 112 * 2**20)

    flops = B * (2 * S * isize * hsize            # V projection (once per batch)
                 + 2 * H * Q_p * S * attn_dim     # scores @ V
                 + 2 * Q_p * hsize * osize_p)     # output projection
    bytes_accessed = (B * S * isize * cds + B * H * Q_p * S * cds
                      + (isize * hsize + hsize * osize_p) * cds
                      + (hsize + osize_p) * 4
                      + B * Q_p * osize_p * ods)

    out_p = pl.pallas_call(
        _make_kernel(num_head, attn_dim),
        out_shape=jax.ShapeDtypeStruct((B, Q_p, osize_p), out_dtype),
        grid_spec=grid_spec,
        compiler_params=pltpu.CompilerParams(
            dimension_semantics=("parallel", "arbitrary"),
            vmem_limit_bytes=vmem_limit_bytes),
        cost_estimate=pl.CostEstimate(flops=flops, transcendentals=0,
                                      bytes_accessed=bytes_accessed),
    )(iK_c, scores_c, wvt, bv2, wot, bo2)

    if Q_p != Q or osize_p != osize:
        out_p = out_p[:, :Q, :osize]
    return out_p


def reference(iK, scores, wv, bv, wo, bo, num_head):
    B, S, isize = iK.shape
    hsize = wv.shape[0]
    adim = hsize // num_head
    Q = scores.shape[2]
    v = jnp.einsum('bsi,hi->bsh', iK, wv) + bv                      # (B,S,hsize)
    vh = v.reshape(B, S, num_head, adim).transpose(0, 2, 1, 3)      # (B,H,S,adim)
    attn = jnp.einsum('bhqs,bhsd->bhqd', scores, vh)                # (B,H,Q,adim)
    attn = attn.transpose(0, 2, 1, 3).reshape(B, Q, hsize)
    return jnp.einsum('bqh,oh->bqo', attn, wo) + bo


if __name__ == "__main__":
    # Small, module-consistent shapes.
    B, S, Q = 2, 8, 8
    isize, hsize, osize, num_head = 32, 32, 32, 8

    key = jax.random.PRNGKey(0)
    k1, k2, k3, k4, k5, k6 = jax.random.split(key, 6)

    iK = jax.random.normal(k1, (B, S, isize), dtype=jnp.float32)
    scores = jax.nn.softmax(
        jax.random.normal(k2, (B, num_head, Q, S), dtype=jnp.float32), axis=-1)

    # Deterministic parameter init (PyTorch Linear weight shape = (out, in)).
    wv = jax.random.normal(k3, (hsize, isize), dtype=jnp.float32) * 0.05
    bv = jax.random.normal(k4, (hsize,), dtype=jnp.float32) * 0.01
    wo = jax.random.normal(k5, (osize, hsize), dtype=jnp.float32) * 0.05
    bo = jax.random.normal(k6, (osize,), dtype=jnp.float32) * 0.01

    tca = jax.jit(functools.partial(taught_cross_attn, num_head=num_head))

    out = jax.block_until_ready(tca(iK, scores, wv, bv, wo, bo))
    ref = reference(iK, scores, wv, bv, wo, bo, num_head)
    assert out.shape == (B, Q, osize)
    assert jnp.allclose(out, ref, atol=1e-5, rtol=1e-5), "f32 mismatch vs reference"

    # bf16 path smoke test (bf16 MXU contractions, f32 accumulation, bf16 out).
    out_bf = jax.block_until_ready(
        tca(iK.astype(jnp.bfloat16), scores.astype(jnp.bfloat16), wv, bv, wo, bo))
    assert out_bf.shape == (B, Q, osize) and out_bf.dtype == jnp.bfloat16
    assert jnp.allclose(out_bf.astype(jnp.float32), ref, atol=0.1, rtol=0.1), \
        "bf16 output diverged from reference"

    print("KERNEL_OK")
</pallas_src>

<mosaic_0001>
module attributes {stable_mosaic.version = 11 : i64} {
  func.func @kernel(%arg0: i32, %arg1: i32, %arg2: memref<1x8x32xf32, #tpu.memory_space<vmem>>, %arg3: memref<1x8x8x8xf32, #tpu.memory_space<vmem>>, %arg4: memref<32x32xf32, #tpu.memory_space<any>>, %arg5: memref<1x32xf32, #tpu.memory_space<vmem>>, %arg6: memref<32x128xf32, #tpu.memory_space<any>>, %arg7: memref<1x128xf32, #tpu.memory_space<vmem>>, %arg8: memref<1x8x128xf32, #tpu.memory_space<vmem>>, %arg9: memref<32x32xf32, #tpu.memory_space<vmem>>, %arg10: memref<32x128xf32, #tpu.memory_space<vmem>>, %arg11: memref<8x32xf32, #tpu.memory_space<vmem>>, %arg12: memref<8x32xf32, #tpu.memory_space<vmem>>, %arg13: memref<2x!tpu.dma_semaphore, #tpu.memory_space<semaphore_mem>>) attributes {dimension_semantics = [#tpu.dimension_semantics<parallel>, #tpu.dimension_semantics<arbitrary>], iteration_bounds = array<i64: 2, 1>, scalar_prefetch = 0 : i64, scratch_operands = 5 : i64, tpu.core_type = #tpu.core_type<tc>, window_params = [{transform_indices = @transform_0, window_bounds = array<i64: 1, 8, 32>}, {transform_indices = @transform_1, window_bounds = array<i64: 1, 8, 8, 8>}, {}, {pipeline_mode = #tpu.pipeline_mode<synchronous>, transform_indices = @transform_3, window_bounds = array<i64: 1, 32>}, {}, {pipeline_mode = #tpu.pipeline_mode<synchronous>, transform_indices = @transform_5, window_bounds = array<i64: 1, 128>}, {transform_indices = @transform_6, window_bounds = array<i64: 1, 8, 128>}]} {
    %c0_i32 = arith.constant 0 : i32
    %0 = arith.cmpi eq, %arg1, %c0_i32 : i32
    %1 = arith.extui %0 : i1 to i32
    %c0_i32_0 = arith.constant 0 : i32
    %2 = arith.cmpi ne, %1, %c0_i32_0 : i32
    scf.if %2 {
      %c0_i32_68 = arith.constant 0 : i32
      %52 = tpu.memref_slice %arg13[%c0_i32_68] : memref<2x!tpu.dma_semaphore, #tpu.memory_space<semaphore_mem>> -> memref<1x!tpu.dma_semaphore, #tpu.memory_space<semaphore_mem>>
      %53 = tpu.memref_squeeze %52 : memref<1x!tpu.dma_semaphore, #tpu.memory_space<semaphore_mem>> -> memref<!tpu.dma_semaphore, #tpu.memory_space<semaphore_mem>>
      tpu.enqueue_dma source(%arg4 : memref<32x32xf32, #tpu.memory_space<any>>) target(%arg9 : memref<32x32xf32, #tpu.memory_space<vmem>>) target_semaphore(%53 : memref<!tpu.dma_semaphore, #tpu.memory_space<semaphore_mem>>)
      %c1_i32 = arith.constant 1 : i32
      %54 = tpu.memref_slice %arg13[%c1_i32] : memref<2x!tpu.dma_semaphore, #tpu.memory_space<semaphore_mem>> -> memref<1x!tpu.dma_semaphore, #tpu.memory_space<semaphore_mem>>
      %55 = tpu.memref_squeeze %54 : memref<1x!tpu.dma_semaphore, #tpu.memory_space<semaphore_mem>> -> memref<!tpu.dma_semaphore, #tpu.memory_space<semaphore_mem>>
      tpu.enqueue_dma source(%arg6 : memref<32x128xf32, #tpu.memory_space<any>>) target(%arg10 : memref<32x128xf32, #tpu.memory_space<vmem>>) target_semaphore(%55 : memref<!tpu.dma_semaphore, #tpu.memory_space<semaphore_mem>>)
      %c0_i32_69 = arith.constant 0 : i32
      %56 = tpu.memref_slice %arg13[%c0_i32_69] : memref<2x!tpu.dma_semaphore, #tpu.memory_space<semaphore_mem>> -> memref<1x!tpu.dma_semaphore, #tpu.memory_space<semaphore_mem>>
      %57 = tpu.memref_squeeze %56 : memref<1x!tpu.dma_semaphore, #tpu.memory_space<semaphore_mem>> -> memref<!tpu.dma_semaphore, #tpu.memory_space<semaphore_mem>>
      tpu.wait_dma2 semaphore(%57 : memref<!tpu.dma_semaphore, #tpu.memory_space<semaphore_mem>>) src(%arg4 : memref<32x32xf32, #tpu.memory_space<any>>) dst(%arg9 : memref<32x32xf32, #tpu.memory_space<vmem>>)
      %c0_70 = arith.constant 0 : index
      %c0_71 = arith.constant 0 : index
      %c0_72 = arith.constant 0 : index
      %58 = vector.load %arg2[%c0_70, %c0_71, %c0_72] : memref<1x8x32xf32, #tpu.memory_space<vmem>>, vector<1x8x32xf32>
      %59 = vector.shape_cast %58 : vector<1x8x32xf32> to vector<8x32xf32>
      %c0_73 = arith.constant 0 : index
      %c0_74 = arith.constant 0 : index
      %60 = vector.load %arg9[%c0_73, %c0_74] : memref<32x32xf32, #tpu.memory_space<vmem>>, vector<32x32xf32>
      %cst_75 = arith.constant dense<0.000000e+00> : vector<8x32xf32>
      %61 = tpu.matmul %59, %60, %cst_75 {dimension_numbers = #tpu.dot_dimension_numbers<[1], [0], [0], [1], [0, 0, 1, 1], [], []>} : vector<8x32xf32>, vector<32x32xf32>, vector<8x32xf32> -> vector<8x32xf32>
      %c0_76 = arith.constant 0 : index
      %c0_77 = arith.constant 0 : index
      %62 = vector.load %arg5[%c0_76, %c0_77] : memref<1x32xf32, #tpu.memory_space<vmem>>, vector<1x32xf32>
      %63 = vector.broadcast %62 : vector<1x32xf32> to vector<8x32xf32>
      %64 = arith.addf %61, %63 : vector<8x32xf32>
      %c0_78 = arith.constant 0 : index
      %c0_79 = arith.constant 0 : index
      %65 = vector.load %arg11[%c0_78, %c0_79] : memref<8x32xf32, #tpu.memory_space<vmem>>, vector<8x32xf32>
      tpu.vector_store %arg11[%c0_78, %c0_79], %64 {strides = array<i32>} : memref<8x32xf32, #tpu.memory_space<vmem>>, vector<8x32xf32>,
      %c1_i32_80 = arith.constant 1 : i32
      %66 = tpu.memref_slice %arg13[%c1_i32_80] : memref<2x!tpu.dma_semaphore, #tpu.memory_space<semaphore_mem>> -> memref<1x!tpu.dma_semaphore, #tpu.memory_space<semaphore_mem>>
      %67 = tpu.memref_squeeze %66 : memref<1x!tpu.dma_semaphore, #tpu.memory_space<semaphore_mem>> -> memref<!tpu.dma_semaphore, #tpu.memory_space<semaphore_mem>>
      tpu.wait_dma2 semaphore(%67 : memref<!tpu.dma_semaphore, #tpu.memory_space<semaphore_mem>>) src(%arg6 : memref<32x128xf32, #tpu.memory_space<any>>) dst(%arg10 : memref<32x128xf32, #tpu.memory_space<vmem>>)
    } else {
    }
    %c0 = arith.constant 0 : index
    %c0_1 = arith.constant 0 : index
    %c0_2 = arith.constant 0 : index
    %c0_3 = arith.constant 0 : index
    %3 = vector.load %arg3[%c0, %c0_1, %c0_2, %c0_3] : memref<1x8x8x8xf32, #tpu.memory_space<vmem>>, vector<1x1x8x8xf32>
    %4 = vector.shape_cast %3 : vector<1x1x8x8xf32> to vector<8x8xf32>
    %c0_4 = arith.constant 0 : index
    %c0_5 = arith.constant 0 : index
    %5 = vector.load %arg11[%c0_4, %c0_5] : memref<8x32xf32, #tpu.memory_space<vmem>>, vector<8x4xf32>
    %cst = arith.constant dense<0.000000e+00> : vector<8x4xf32>
    %6 = tpu.matmul %4, %5, %cst {dimension_numbers = #tpu.dot_dimension_numbers<[1], [0], [0], [1], [0, 0, 1, 1], [], []>} : vector<8x8xf32>, vector<8x4xf32>, vector<8x4xf32> -> vector<8x4xf32>
    %c0_6 = arith.constant 0 : index
    %c0_7 = arith.constant 0 : index
    %7 = vector.load %arg12[%c0_6, %c0_7] : memref<8x32xf32, #tpu.memory_space<vmem>>, vector<8x4xf32>
    tpu.vector_store %arg12[%c0_6, %c0_7], %6 {strides = array<i32>} : memref<8x32xf32, #tpu.memory_space<vmem>>, vector<8x4xf32>,
    %c0_8 = arith.constant 0 : index
    %c1 = arith.constant 1 : index
    %c0_9 = arith.constant 0 : index
    %c0_10 = arith.constant 0 : index
    %8 = vector.load %arg3[%c0_8, %c1, %c0_9, %c0_10] : memref<1x8x8x8xf32, #tpu.memory_space<vmem>>, vector<1x1x8x8xf32>
    %9 = vector.shape_cast %8 : vector<1x1x8x8xf32> to vector<8x8xf32>
    %c0_11 = arith.constant 0 : index
    %c4 = arith.constant 4 : index
    %10 = vector.load %arg11[%c0_11, %c4] : memref<8x32xf32, #tpu.memory_space<vmem>>, vector<8x4xf32>
    %cst_12 = arith.constant dense<0.000000e+00> : vector<8x4xf32>
    %11 = tpu.matmul %9, %10, %cst_12 {dimension_numbers = #tpu.dot_dimension_numbers<[1], [0], [0], [1], [0, 0, 1, 1], [], []>} : vector<8x8xf32>, vector<8x4xf32>, vector<8x4xf32> -> vector<8x4xf32>
    %c0_13 = arith.constant 0 : index
    %c4_14 = arith.constant 4 : index
    %12 = vector.load %arg12[%c0_13, %c4_14] : memref<8x32xf32, #tpu.memory_space<vmem>>, vector<8x4xf32>
    tpu.vector_store %arg12[%c0_13, %c4_14], %11 {strides = array<i32>} : memref<8x32xf32, #tpu.memory_space<vmem>>, vector<8x4xf32>,
    %c0_15 = arith.constant 0 : index
    %c2 = arith.constant 2 : index
    %c0_16 = arith.constant 0 : index
    %c0_17 = arith.constant 0 : index
    %13 = vector.load %arg3[%c0_15, %c2, %c0_16, %c0_17] : memref<1x8x8x8xf32, #tpu.memory_space<vmem>>, vector<1x1x8x8xf32>
    %14 = vector.shape_cast %13 : vector<1x1x8x8xf32> to vector<8x8xf32>
    %c0_18 = arith.constant 0 : index
    %c8 = arith.constant 8 : index
    %15 = vector.load %arg11[%c0_18, %c8] : memref<8x32xf32, #tpu.memory_space<vmem>>, vector<8x4xf32>
    %cst_19 = arith.constant dense<0.000000e+00> : vector<8x4xf32>
    %16 = tpu.matmul %14, %15, %cst_19 {dimension_numbers = #tpu.dot_dimension_numbers<[1], [0], [0], [1], [0, 0, 1, 1], [], []>} : vector<8x8xf32>, vector<8x4xf32>, vector<8x4xf32> -> vector<8x4xf32>
    %c0_20 = arith.constant 0 : index
    %c8_21 = arith.constant 8 : index
    %17 = vector.load %arg12[%c0_20, %c8_21] : memref<8x32xf32, #tpu.memory_space<vmem>>, vector<8x4xf32>
    tpu.vector_store %arg12[%c0_20, %c8_21], %16 {strides = array<i32>} : memref<8x32xf32, #tpu.memory_space<vmem>>, vector<8x4xf32>,
    %c0_22 = arith.constant 0 : index
    %c3 = arith.constant 3 : index
    %c0_23 = arith.constant 0 : index
    %c0_24 = arith.constant 0 : index
    %18 = vector.load %arg3[%c0_22, %c3, %c0_23, %c0_24] : memref<1x8x8x8xf32, #tpu.memory_space<vmem>>, vector<1x1x8x8xf32>
    %19 = vector.shape_cast %18 : vector<1x1x8x8xf32> to vector<8x8xf32>
    %c0_25 = arith.constant 0 : index
    %c12 = arith.constant 12 : index
    %20 = vector.load %arg11[%c0_25, %c12] : memref<8x32xf32, #tpu.memory_space<vmem>>, vector<8x4xf32>
    %cst_26 = arith.constant dense<0.000000e+00> : vector<8x4xf32>
    %21 = tpu.matmul %19, %20, %cst_26 {dimension_numbers = #tpu.dot_dimension_numbers<[1], [0], [0], [1], [0, 0, 1, 1], [], []>} : vector<8x8xf32>, vector<8x4xf32>, vector<8x4xf32> -> vector<8x4xf32>
    %c0_27 = arith.constant 0 : index
    %c12_28 = arith.constant 12 : index
    %22 = vector.load %arg12[%c0_27, %c12_28] : memref<8x32xf32, #tpu.memory_space<vmem>>, vector<8x4xf32>
    tpu.vector_store %arg12[%c0_27, %c12_28], %21 {strides = array<i32>} : memref<8x32xf32, #tpu.memory_space<vmem>>, vector<8x4xf32>,
    %c0_29 = arith.constant 0 : index
    %c4_30 = arith.constant 4 : index
    %c0_31 = arith.constant 0 : index
    %c0_32 = arith.constant 0 : index
    %23 = vector.load %arg3[%c0_29, %c4_30, %c0_31, %c0_32] : memref<1x8x8x8xf32, #tpu.memory_space<vmem>>, vector<1x1x8x8xf32>
    %24 = vector.shape_cast %23 : vector<1x1x8x8xf32> to vector<8x8xf32>
    %c0_33 = arith.constant 0 : index
    %c16 = arith.constant 16 : index
    %25 = vector.load %arg11[%c0_33, %c16] : memref<8x32xf32, #tpu.memory_space<vmem>>, vector<8x4xf32>
    %cst_34 = arith.constant dense<0.000000e+00> : vector<8x4xf32>
    %26 = tpu.matmul %24, %25, %cst_34 {dimension_numbers = #tpu.dot_dimension_numbers<[1], [0], [0], [1], [0, 0, 1, 1], [], []>} : vector<8x8xf32>, vector<8x4xf32>, vector<8x4xf32> -> vector<8x4xf32>
    %c0_35 = arith.constant 0 : index
    %c16_36 = arith.constant 16 : index
    %27 = vector.load %arg12[%c0_35, %c16_36] : memref<8x32xf32, #tpu.memory_space<vmem>>, vector<8x4xf32>
    tpu.vector_store %arg12[%c0_35, %c16_36], %26 {strides = array<i32>} : memref<8x32xf32, #tpu.memory_space<vmem>>, vector<8x4xf32>,
    %c0_37 = arith.constant 0 : index
    %c5 = arith.constant 5 : index
    %c0_38 = arith.constant 0 : index
    %c0_39 = arith.constant 0 : index
    %28 = vector.load %arg3[%c0_37, %c5, %c0_38, %c0_39] : memref<1x8x8x8xf32, #tpu.memory_space<vmem>>, vector<1x1x8x8xf32>
    %29 = vector.shape_cast %28 : vector<1x1x8x8xf32> to vector<8x8xf32>
    %c0_40 = arith.constant 0 : index
    %c20 = arith.constant 20 : index
    %30 = vector.load %arg11[%c0_40, %c20] : memref<8x32xf32, #tpu.memory_space<vmem>>, vector<8x4xf32>
    %cst_41 = arith.constant dense<0.000000e+00> : vector<8x4xf32>
    %31 = tpu.matmul %29, %30, %cst_41 {dimension_numbers = #tpu.dot_dimension_numbers<[1], [0], [0], [1], [0, 0, 1, 1], [], []>} : vector<8x8xf32>, vector<8x4xf32>, vector<8x4xf32> -> vector<8x4xf32>
    %c0_42 = arith.constant 0 : index
    %c20_43 = arith.constant 20 : index
    %32 = vector.load %arg12[%c0_42, %c20_43] : memref<8x32xf32, #tpu.memory_space<vmem>>, vector<8x4xf32>
    tpu.vector_store %arg12[%c0_42, %c20_43], %31 {strides = array<i32>} : memref<8x32xf32, #tpu.memory_space<vmem>>, vector<8x4xf32>,
    %c0_44 = arith.constant 0 : index
    %c6 = arith.constant 6 : index
    %c0_45 = arith.constant 0 : index
    %c0_46 = arith.constant 0 : index
    %33 = vector.load %arg3[%c0_44, %c6, %c0_45, %c0_46] : memref<1x8x8x8xf32, #tpu.memory_space<vmem>>, vector<1x1x8x8xf32>
    %34 = vector.shape_cast %33 : vector<1x1x8x8xf32> to vector<8x8xf32>
    %c0_47 = arith.constant 0 : index
    %c24 = arith.constant 24 : index
    %35 = vector.load %arg11[%c0_47, %c24] : memref<8x32xf32, #tpu.memory_space<vmem>>, vector<8x4xf32>
    %cst_48 = arith.constant dense<0.000000e+00> : vector<8x4xf32>
    %36 = tpu.matmul %34, %35, %cst_48 {dimension_numbers = #tpu.dot_dimension_numbers<[1], [0], [0], [1], [0, 0, 1, 1], [], []>} : vector<8x8xf32>, vector<8x4xf32>, vector<8x4xf32> -> vector<8x4xf32>
    %c0_49 = arith.constant 0 : index
    %c24_50 = arith.constant 24 : index
    %37 = vector.load %arg12[%c0_49, %c24_50] : memref<8x32xf32, #tpu.memory_space<vmem>>, vector<8x4xf32>
    tpu.vector_store %arg12[%c0_49, %c24_50], %36 {strides = array<i32>} : memref<8x32xf32, #tpu.memory_space<vmem>>, vector<8x4xf32>,
    %c0_51 = arith.constant 0 : index
    %c7 = arith.constant 7 : index
    %c0_52 = arith.constant 0 : index
    %c0_53 = arith.constant 0 : index
    %38 = vector.load %arg3[%c0_51, %c7, %c0_52, %c0_53] : memref<1x8x8x8xf32, #tpu.memory_space<vmem>>, vector<1x1x8x8xf32>
    %39 = vector.shape_cast %38 : vector<1x1x8x8xf32> to vector<8x8xf32>
    %c0_54 = arith.constant 0 : index
    %c28 = arith.constant 28 : index
    %40 = vector.load %arg11[%c0_54, %c28] : memref<8x32xf32, #tpu.memory_space<vmem>>, vector<8x4xf32>
    %cst_55 = arith.constant dense<0.000000e+00> : vector<8x4xf32>
    %41 = tpu.matmul %39, %40, %cst_55 {dimension_numbers = #tpu.dot_dimension_numbers<[1], [0], [0], [1], [0, 0, 1, 1], [], []>} : vector<8x8xf32>, vector<8x4xf32>, vector<8x4xf32> -> vector<8x4xf32>
    %c0_56 = arith.constant 0 : index
    %c28_57 = arith.constant 28 : index
    %42 = vector.load %arg12[%c0_56, %c28_57] : memref<8x32xf32, #tpu.memory_space<vmem>>, vector<8x4xf32>
    tpu.vector_store %arg12[%c0_56, %c28_57], %41 {strides = array<i32>} : memref<8x32xf32, #tpu.memory_space<vmem>>, vector<8x4xf32>,
    %c0_58 = arith.constant 0 : index
    %c0_59 = arith.constant 0 : index
    %43 = vector.load %arg12[%c0_58, %c0_59] : memref<8x32xf32, #tpu.memory_space<vmem>>, vector<8x32xf32>
    %c0_60 = arith.constant 0 : index
    %c0_61 = arith.constant 0 : index
    %44 = vector.load %arg10[%c0_60, %c0_61] : memref<32x128xf32, #tpu.memory_space<vmem>>, vector<32x128xf32>
    %cst_62 = arith.constant dense<0.000000e+00> : vector<8x128xf32>
    %45 = tpu.matmul %43, %44, %cst_62 {dimension_numbers = #tpu.dot_dimension_numbers<[1], [0], [0], [1], [0, 0, 1, 1], [], []>} : vector<8x32xf32>, vector<32x128xf32>, vector<8x128xf32> -> vector<8x128xf32>
    %c0_63 = arith.constant 0 : index
    %c0_64 = arith.constant 0 : index
    %46 = vector.load %arg7[%c0_63, %c0_64] : memref<1x128xf32, #tpu.memory_space<vmem>>, vector<1x128xf32>
    %47 = vector.broadcast %46 : vector<1x128xf32> to vector<8x128xf32>
    %48 = arith.addf %45, %47 : vector<8x128xf32>
    %c0_65 = arith.constant 0 : index
    %c0_66 = arith.constant 0 : index
    %c0_67 = arith.constant 0 : index
    %49 = vector.load %arg8[%c0_65, %c0_66, %c0_67] : memref<1x8x128xf32, #tpu.memory_space<vmem>>, vector<1x8x128xf32>
    %50 = vector.shape_cast %49 : vector<1x8x128xf32> to vector<8x128xf32>
    %51 = vector.shape_cast %48 : vector<8x128xf32> to vector<1x8x128xf32>
    tpu.vector_store %arg8[%c0_65, %c0_66, %c0_67], %51 {strides = array<i32>} : memref<1x8x128xf32, #tpu.memory_space<vmem>>, vector<1x8x128xf32>,
    return
  }
  func.func @transform_0(%arg0: i32, %arg1: i32) -> (i32, i32, i32) {
    %c0_i32 = arith.constant 0 : i32
    %c0_i32_0 = arith.constant 0 : i32
    %c0_i32_1 = arith.constant 0 : i32
    return %arg0, %c0_i32, %c0_i32_0 : i32, i32, i32
  }
  func.func @transform_1(%arg0: i32, %arg1: i32) -> (i32, i32, i32, i32) {
    %c0_i32 = arith.constant 0 : i32
    %c0_i32_0 = arith.constant 0 : i32
    %c0_i32_1 = arith.constant 0 : i32
    return %arg0, %c0_i32, %arg1, %c0_i32_0 : i32, i32, i32, i32
  }
  func.func @transform_3(%arg0: i32, %arg1: i32) -> (i32, i32) {
    %c0_i32 = arith.constant 0 : i32
    %c0_i32_0 = arith.constant 0 : i32
    %c0_i32_1 = arith.constant 0 : i32
    return %c0_i32, %c0_i32_0 : i32, i32
  }
  func.func @transform_5(%arg0: i32, %arg1: i32) -> (i32, i32) {
    %c0_i32 = arith.constant 0 : i32
    %c0_i32_0 = arith.constant 0 : i32
    %c0_i32_1 = arith.constant 0 : i32
    return %c0_i32, %c0_i32_0 : i32, i32
  }
  func.func @transform_6(%arg0: i32, %arg1: i32) -> (i32, i32, i32) {
    %c0_i32 = arith.constant 0 : i32
    %c0_i32_0 = arith.constant 0 : i32
    return %arg0, %arg1, %c0_i32 : i32, i32, i32
  }
}

</mosaic_0001>

<llo_original>
// kernel: taught_cross_attn.1
$region0: #{taught_cross_attn.1}
  #allocation0 [shape = 'u32[]', space=smem, size = 0x4, offset = 0x4, fixed_abs, tag = 'smem constant byte address 0x4 - core index']
  #allocation1 [shape = 'u32[144,128]{1,0:T(1,128)}', space=vmem, size = 0x12000, scoped, tag = 'internal scratch']
  #allocation2 [shape = 'f32[32,32]{1,0:T(8,128)}', space=vmem, size = 0x4000, scoped, tag = 'scratch operand']
  #allocation3 [shape = 'f32[32,128]{1,0:T(8,128)}', space=vmem, size = 0x4000, scoped, tag = 'scratch operand']
  #allocation4 [shape = 'f32[8,32]{1,0:T(8,128)}', space=vmem, size = 0x1000, scoped, tag = 'scratch operand']
  #allocation5 [shape = 'f32[8,32]{1,0:T(8,128)}', space=vmem, size = 0x1000, scoped, tag = 'scratch operand']
  #allocation6 [shape = 's32[2]{0}', space=sflag, size = 0x8, scoped, tag = 'scratch operand']
  #allocation9 [shape = 's32[]', space=sflag, size = 0x4, offset = 0, fixed_abs, tag = 'sflag constant byte address 0x0 - dummy sync flag']
  #allocation10 [shape = 's32[]', space=sflag, size = 0x4, offset = 0, fixed_abs, tag = 'sflag constant byte address 0x0 - dummy sync flag']
  %s0 = inlined_call_operand.vmem [shape: f32[2,8,32], index: 0, kind: input, shape index: {}]
  %s1 = inlined_call_operand.vmem [shape: f32[2,8,8,8], index: 1, kind: input, shape index: {}]
  %s2 = inlined_call_operand.vmem [shape: f32[32,32], index: 2, kind: input, shape index: {}]
  %s3 = inlined_call_operand.vmem [shape: f32[1,32], index: 3, kind: input, shape index: {}]
  %s4 = inlined_call_operand.vmem [shape: f32[32,128], index: 4, kind: input, shape index: {}]
  %s5 = inlined_call_operand.vmem [shape: f32[1,128], index: 5, kind: input, shape index: {}]
  %s6 = inlined_call_operand.hbm [shape: f32[2,8,128], index: 6, kind: output, shape index: {}]
  %s7 = sld [smem:[#allocation0]]
  $region121: #{taught_cross_attn.1} parent=0
    _
  %s9 = ssub.s32 1, %s7
  %s10 = scalar_select 0, %s9, %s7
  $region1: #{taught_cross_attn.1} parent=0
    #allocation7 [shape = 'u8[8192]{0}', space=vmem, size = 0x2000, scoped, tag = 'output window, operand 0']
    #allocation8 [shape = 's32[2]{0}', space=sflag, size = 0x8, scoped, tag = 'scoped memory for taught_cross_attn.1']
    %11 = vsyncpa [#allocation8], 0
    %s12 = scalar_lea.sflag [#allocation8], 1
    %13 = vsyncpa %s12, 0
    loop: start=0, step=1, limit=4
    $region2: #{taught_cross_attn.1} parent=1 // loop_pre_header
      _
    $region3: #{taught_cross_attn.1} parent=1 // loop_header
      %s15 = sphi 0, %s19
      %p16 = scmp.ge.s32.totalorder %s15, 4
      %s22 = sphi 0, %s34
      %s23 = sphi 0, %s30
      %s24 = sphi 0, %s22
      %s25 = sphi 0, %s23
      %s26 = sphi 0, %s24
      %s27 = sphi 0, %s25
      %s37 = sphi 0, %s39
      %s40 = sphi 0, %s37
      %s41 = sphi 0, %s40
      %s57 = sphi 0, %s41
      %s65 = sphi 0, %s67
      %s68 = sphi 0, %s65
      %s69 = sphi 0, %s68
      %s85 = sphi 0, %s69
      %s89 = sphi 0, %s89
      %s91 = sphi 0, %s89
      %s92 = sphi 0, %s91
      %s106 = sphi 0, %s92
      %s110 = sphi 0, %s110
      %s112 = sphi 0, %s110
      %s113 = sphi 0, %s112
      %s127 = sphi 0, %s113
      %s135 = sphi 0, %s137
      %s138 = sphi 0, %s135
      %s139 = sphi 0, %s138
      %s155 = sphi 0, %s139
    $region4: #{taught_cross_attn.1} parent=1 // loop_header_branch
      %18 = sbr.rel (%p16) target = $region8
    $region5: #{taught_cross_attn.1} parent=1 // loop_body
      %s20 = ssub.s32 %s15, 1
      %s21 = ssub.s32 %s15, 2
      %s28 = sadd.s32 1, %s23
      %p29 = scmp.ge.s32.totalorder %s28, 1
      %s30 = scalar_select %p29, 0, %s28
      %s31 = sadd.s32 1, %s22
      %s32 = scalar_select %p29, %s31, %s22
      %p33 = scmp.ge.s32.totalorder %s32, 2
      %s34 = scalar_select %p33, 0, %s32
      %s35 = ssub.s32 %s22, %s34
      %p36 = scmp.eq.s32.totalorder %s35, 0
      %s38 = sadd.s32 %s37, 1
      %s39 = scalar_select %p36, %s37, %s38
      %p42 = pneg %p36
      %p43 = scmp.eq.s32.totalorder %s15, 1
      %p44 = por %p42, %p43
      %p45 = scmp.ne.s32.totalorder %s37, %s40
      %p46 = scmp.eq.s32.totalorder %s15, 0
      %p47 = por %p45, %p46
      %p48 = scmp.ne.s32.totalorder %s37, %s40
      %p49 = scmp.eq.s32.totalorder %s20, 1
      %p50 = por %p48, %p49
      %p51 = scmp.ne.s32.totalorder %s40, %s41
      %p52 = scmp.eq.s32.totalorder %s20, 0
      %p53 = por %p51, %p52
      %p54 = scmp.ne.s32.totalorder %s40, %s41
      %p55 = scmp.eq.s32.totalorder %s21, 1
      %p56 = por %p54, %p55
      %p58 = scmp.ne.s32.totalorder %s41, %s57
      %p59 = scmp.eq.s32.totalorder %s21, 0
      %p60 = por %p58, %p59
      %s61 = ssub.s32 %s22, %s34
      %s62 = ssub.s32 %s23, %s30
      %s63 = sor.u32 %s61, %s62
      %p64 = scmp.eq.s32.totalorder %s63, 0
      %s66 = sadd.s32 %s65, 1
      %s67 = scalar_select %p64, %s65, %s66
      %p70 = pneg %p64
      %p71 = scmp.eq.s32.totalorder %s15, 1
      %p72 = por %p70, %p71
      %p73 = scmp.ne.s32.totalorder %s65, %s68
      %p74 = scmp.eq.s32.totalorder %s15, 0
      %p75 = por %p73, %p74
      %p76 = scmp.ne.s32.totalorder %s65, %s68
      %p77 = scmp.eq.s32.totalorder %s20, 1
      %p78 = por %p76, %p77
      %p79 = scmp.ne.s32.totalorder %s68, %s69
      %p80 = scmp.eq.s32.totalorder %s20, 0
      %p81 = por %p79, %p80
      %p82 = scmp.ne.s32.totalorder %s68, %s69
      %p83 = scmp.eq.s32.totalorder %s21, 1
      %p84 = por %p82, %p83
      %p86 = scmp.ne.s32.totalorder %s69, %s85
      %p87 = scmp.eq.s32.totalorder %s21, 0
      %p88 = por %p86, %p87
      %s90 = sadd.s32 %s89, 1
      %p93 = scmp.eq.s32.totalorder %s15, 1
      %p94 = scmp.ne.s32.totalorder %s89, %s91
      %p95 = scmp.eq.s32.totalorder %s15, 0
      %p96 = por %p94, %p95
      %p97 = scmp.ne.s32.totalorder %s89, %s91
      %p98 = scmp.eq.s32.totalorder %s20, 1
      %p99 = por %p97, %p98
      %p100 = scmp.ne.s32.totalorder %s91, %s92
      %p101 = scmp.eq.s32.totalorder %s20, 0
      %p102 = por %p100, %p101
      %p103 = scmp.ne.s32.totalorder %s91, %s92
      %p104 = scmp.eq.s32.totalorder %s21, 1
      %p105 = por %p103, %p104
      %p107 = scmp.ne.s32.totalorder %s92, %s106
      %p108 = scmp.eq.s32.totalorder %s21, 0
      %p109 = por %p107, %p108
      %s111 = sadd.s32 %s110, 1
      %p114 = scmp.eq.s32.totalorder %s15, 1
      %p115 = scmp.ne.s32.totalorder %s110, %s112
      %p116 = scmp.eq.s32.totalorder %s15, 0
      %p117 = por %p115, %p116
      %p118 = scmp.ne.s32.totalorder %s110, %s112
      %p119 = scmp.eq.s32.totalorder %s20, 1
      %p120 = por %p118, %p119
      %p121 = scmp.ne.s32.totalorder %s112, %s113
      %p122 = scmp.eq.s32.totalorder %s20, 0
      %p123 = por %p121, %p122
      %p124 = scmp.ne.s32.totalorder %s112, %s113
      %p125 = scmp.eq.s32.totalorder %s21, 1
      %p126 = por %p124, %p125
      %p128 = scmp.ne.s32.totalorder %s113, %s127
      %p129 = scmp.eq.s32.totalorder %s21, 0
      %p130 = por %p128, %p129
      %s131 = ssub.s32 %s22, %s34
      %s132 = ssub.s32 %s23, %s30
      %s133 = sor.u32 %s131, %s132
      %p134 = scmp.eq.s32.totalorder %s133, 0
      %s136 = sadd.s32 %s135, 1
      %s137 = scalar_select %p134, %s135, %s136
      %p140 = pneg %p134
      %p141 = scmp.eq.s32.totalorder %s15, 1
      %p142 = por %p140, %p141
      %p143 = scmp.ne.s32.totalorder %s135, %s138
      %p144 = scmp.eq.s32.totalorder %s15, 0
      %p145 = por %p143, %p144
      %p146 = scmp.ne.s32.totalorder %s135, %s138
      %p147 = scmp.eq.s32.totalorder %s20, 1
      %p148 = por %p146, %p147
      %p149 = scmp.ne.s32.totalorder %s138, %s139
      %p150 = scmp.eq.s32.totalorder %s20, 0
      %p151 = por %p149, %p150
      %p152 = scmp.ne.s32.totalorder %s138, %s139
      %p153 = scmp.eq.s32.totalorder %s21, 1
      %p154 = por %p152, %p153
      %p156 = scmp.ne.s32.totalorder %s139, %s155
      %p157 = scmp.eq.s32.totalorder %s21, 0
      %p158 = por %p156, %p157
      %p159 = scmp.le.s32.totalorder 1, %s15
      %p160 = scmp.lt.s32.totalorder %s15, 3
      %p161 = pnand %p159, %p160
      %p162 = pneg %p161
      // Predicated region
      $region9: #{taught_cross_attn.1} parent=5 // pred_check
        _
      $region10: #{taught_cross_attn.1} parent=5 // pred_check_branch
        %164 = sbr.rel (%p161) target = $region12
      $region11: #{taught_cross_attn.1} parent=5 // pred_region
        %s165 = ssub.s32 %s15, 1
        // Predicated region
        $region13: #{taught_cross_attn.1} parent=11 // pred_check
          %p166 = pneg %p102
        $region14: #{taught_cross_attn.1} parent=11 // pred_check_branch
          %168 = sbr.rel (%p166) target = $region16
        $region15: #{taught_cross_attn.1} parent=11 // pred_region
          _
        $region16: #{taught_cross_attn.1} parent=11 // pred_fallthru
          _
        // Predicated region
        $region17: #{taught_cross_attn.1} parent=11 // pred_check
          %p169 = pneg %p123
        $region18: #{taught_cross_attn.1} parent=11 // pred_check_branch
          %171 = sbr.rel (%p169) target = $region20
        $region19: #{taught_cross_attn.1} parent=11 // pred_region
          _
        $region20: #{taught_cross_attn.1} parent=11 // pred_fallthru
          _
      $region12: #{taught_cross_attn.1} parent=5 // pred_fallthru
        _
      %p172 = scmp.lt.s32.totalorder %s15, 2
      // Predicated region
      $region21: #{taught_cross_attn.1} parent=5 // pred_check
        %p173 = pneg %p172
      $region22: #{taught_cross_attn.1} parent=5 // pred_check_branch
        %175 = sbr.rel (%p173) target = $region24
      $region23: #{taught_cross_attn.1} parent=5 // pred_region
        // Predicated region
        $region25: #{taught_cross_attn.1} parent=23 // pred_check
          %p176 = pneg %p47
        $region26: #{taught_cross_attn.1} parent=23 // pred_check_branch
          %178 = sbr.rel (%p176) target = $region28
        $region27: #{taught_cross_attn.1} parent=23 // pred_region
          %p179 = scmp.lt.s32.totalorder %s22, 1
          %s180 = scalar_select %p179, %s22, 1
          %s181 = smul.addr %s180, 8
          %s182 = scalar_lea.vmem %s0, %s181
        $region28: #{taught_cross_attn.1} parent=23 // pred_fallthru
          _
        // Predicated region
        $region29: #{taught_cross_attn.1} parent=23 // pred_check
          %p183 = pneg %p75
        $region30: #{taught_cross_attn.1} parent=23 // pred_check_branch
          %185 = sbr.rel (%p183) target = $region32
        $region31: #{taught_cross_attn.1} parent=23 // pred_region
          %p186 = scmp.lt.s32.totalorder %s22, 1
          %s187 = scalar_select %p186, %s22, 1
          %p188 = scmp.lt.s32.totalorder %s23, 0
          %s189 = scalar_select %p188, %s23, 0
          %s190 = smul.addr %s187, 8
          %s191 = sadd.s32 %s189, %s190
          %s192 = smul.addr %s191, 8
          %s193 = scalar_lea.vmem %s1, %s192
        $region32: #{taught_cross_attn.1} parent=23 // pred_fallthru
          _
      $region24: #{taught_cross_attn.1} parent=5 // pred_fallthru
        _
      %p194 = scmp.le.s32.totalorder 1, %s15
      %p195 = scmp.lt.s32.totalorder %s15, 3
      %p196 = pnand %p194, %p195
      %p197 = pneg %p196
      // Predicated region
      $region33: #{taught_cross_attn.1} parent=5 // pred_check
        _
      $region34: #{taught_cross_attn.1} parent=5 // pred_check_branch
        %199 = sbr.rel (%p196) target = $region36
      $region35: #{taught_cross_attn.1} parent=5 // pred_region
        %s200 = ssub.s32 %s15, 1
        %p201 = scmp.lt.s32.totalorder %s24, 1
        %s202 = scalar_select %p201, %s24, 1
        %s203 = smul.addr %s202, 8
        %s204 = scalar_lea.vmem %s0, %s203
        %p205 = pneg %p53
        %p206 = pneg %p50
        %p207 = scmp.lt.s32.totalorder %s24, 1
        %s208 = scalar_select %p207, %s24, 1
        %p209 = scmp.lt.s32.totalorder %s25, 0
        %s210 = scalar_select %p209, %s25, 0
        %s211 = smul.addr %s208, 8
        %s212 = sadd.s32 %s210, %s211
        %s213 = smul.addr %s212, 8
        %s214 = scalar_lea.vmem %s1, %s213
        %p215 = pneg %p81
        %p216 = pneg %p78
        %p217 = pneg %p102
        %p218 = pneg %p99
        %p219 = pneg %p123
        %p220 = pneg %p120
        %p221 = pneg %p151
        %p222 = pneg %p148
        %s223 = sand.u32 %s138, 1
        %s224 = scalar_lea.sflag [#allocation8], %s223
        %s225 = sand.u32 %s138, 1
        %s226 = smul.addr %s225, 8
        %s227 = scalar_lea.vmem [#allocation7], %s226
        %p228 = scmp.lt.s32.totalorder %s24, 1
        %s229 = scalar_select %p228, %s24, 1
        %s230 = smul.addr %s229, 8
        %s231 = scalar_lea.vmem %s0, %s230
        %p232 = scmp.lt.s32.totalorder %s24, 1
        %s233 = scalar_select %p232, %s24, 1
        %p234 = scmp.lt.s32.totalorder %s25, 0
        %s235 = scalar_select %p234, %s25, 0
        %s236 = smul.addr %s233, 8
        %s237 = sadd.s32 %s235, %s236
        %s238 = smul.addr %s237, 8
        %s239 = scalar_lea.vmem %s1, %s238
        %p240 = scmp.eq.s32.totalorder %s25, 0
        // Predicated region
        $region37: #{taught_cross_attn.1} parent=35 // pred_check
          %p241 = pneg %p240
        $region38: #{taught_cross_attn.1} parent=35 // pred_check_branch
          %243 = sbr.rel (%p241) target = $region40
        $region39: #{taught_cross_attn.1} parent=35 // pred_region
          %p245 = scmp.lt.u32.totalorder 32, 8
          %p246 = pneg %p245
          // Predicated region
          $region41: #{taught_cross_attn.1} parent=39 // pred_check
            _
          $region42: #{taught_cross_attn.1} parent=39 // pred_check_branch
            %248 = sbr.rel (%p245) target = $region44
          $region43: #{taught_cross_attn.1} parent=39 // pred_region
            %s263 = sand.u32 32, 7
            %p264 = scmp.eq.s32.totalorder %s263, 0
            // Predicated region
            $region56: #{taught_cross_attn.1} parent=43 // pred_check
              %p265 = pneg %p264
            $region57: #{taught_cross_attn.1} parent=43 // pred_check_branch
              %267 = sbr.rel (%p265) target = $region59
            $region58: #{taught_cross_attn.1} parent=43 // pred_region
              loop: start=0, step=1, limit=1
              $region60: #{taught_cross_attn.1} parent=58 // loop_pre_header
                _
              $region61: #{taught_cross_attn.1} parent=58 // loop_header
                %s269 = sphi 0, %s273
                %p270 = scmp.ge.s32.totalorder %s269, 1
                %s274 = sphi %s2, %s2
                %s275 = sphi [#allocation2], [#allocation2]
              $region62: #{taught_cross_attn.1} parent=58 // loop_header_branch
                %272 = sbr.rel (%p270) target = $region66
              $region63: #{taught_cross_attn.1} parent=58 // loop_body
                %v276 = vld [vmem:[%s274] sm:$0xff]
                %277 = vst [vmem:[%s275] sm:$0xff] %v276
                %v278 = vld [vmem:[%s274 + $0x8] sm:$0xff]
                %279 = vst [vmem:[%s275 + $0x8] sm:$0xff] %v278
                %v280 = vld [vmem:[%s274 + $0x10] sm:$0xff]
                %281 = vst [vmem:[%s275 + $0x10] sm:$0xff] %v280
                %v282 = vld [vmem:[%s274 + $0x18] sm:$0xff]
                %283 = vst [vmem:[%s275 + $0x18] sm:$0xff] %v282
              $region64: #{taught_cross_attn.1} parent=58 // loop_footer
                %s273 = sadd.s32 1, %s269
              $region65: #{taught_cross_attn.1} parent=58 // loop_footer_branch
                %268 = sbr.rel target = $region61
              $region66: #{taught_cross_attn.1} parent=58 // loop_exit
                _
            $region59: #{taught_cross_attn.1} parent=43 // pred_fallthru
              _
            %p284 = pneg %p264
            // Predicated region
            $region67: #{taught_cross_attn.1} parent=43 // pred_check
              _
            $region68: #{taught_cross_attn.1} parent=43 // pred_check_branch
              %286 = sbr.rel (%p264) target = $region70
            $region69: #{taught_cross_attn.1} parent=43 // pred_region
              %s287 = sand.u32 32, 7
            $region70: #{taught_cross_attn.1} parent=43 // pred_fallthru
              _
          $region44: #{taught_cross_attn.1} parent=39 // pred_fallthru
            _
          // Predicated region
          $region45: #{taught_cross_attn.1} parent=39 // pred_check
            %p249 = pneg %p245
          $region46: #{taught_cross_attn.1} parent=39 // pred_check_branch
            %251 = sbr.rel (%p249) target = $region48
          $region47: #{taught_cross_attn.1} parent=39 // pred_region
            %s252 = sshllo.u32 0, 32
            loop: start=0, step=1, limit=1
            $region49: #{taught_cross_attn.1} parent=47 // loop_pre_header
              _
            $region50: #{taught_cross_attn.1} parent=47 // loop_header
              %s254 = sphi 0, %s258
              %p255 = scmp.ge.s32.totalorder %s254, 1
              %s259 = sphi %s2, %s2
              %s260 = sphi [#allocation2], [#allocation2]
            $region51: #{taught_cross_attn.1} parent=47 // loop_header_branch
              %257 = sbr.rel (%p255) target = $region55
            $region52: #{taught_cross_attn.1} parent=47 // loop_body
              %v261 = vld [vmem:[%s259] sm:%s252]
              %262 = vst [vmem:[%s260] sm:%s252] %v261
            $region53: #{taught_cross_attn.1} parent=47 // loop_footer
              %s258 = sadd.s32 1, %s254
            $region54: #{taught_cross_attn.1} parent=47 // loop_footer_branch
              %253 = sbr.rel target = $region50
            $region55: #{taught_cross_attn.1} parent=47 // loop_exit
              _
          $region48: #{taught_cross_attn.1} parent=39 // pred_fallthru
            _
          // Predicated region
          $region71: #{taught_cross_attn.1} parent=39 // pred_check
            _
          $region72: #{taught_cross_attn.1} parent=39 // pred_check_branch
            %290 = sbr.rel (0) target = $region74
          $region73: #{taught_cross_attn.1} parent=39 // pred_region
            %291 = vsyncadd [#allocation6], 512
          $region74: #{taught_cross_attn.1} parent=39 // pred_fallthru
            _
          %s292 = scalar_lea.sflag [#allocation6], 1
          %p294 = scmp.lt.u32.totalorder 32, 8
          %p295 = pneg %p294
          // Predicated region
          $region75: #{taught_cross_attn.1} parent=39 // pred_check
            _
          $region76: #{taught_cross_attn.1} parent=39 // pred_check_branch
            %297 = sbr.rel (%p294) target = $region78
          $region77: #{taught_cross_attn.1} parent=39 // pred_region
            %s312 = sand.u32 32, 7
            %p313 = scmp.eq.s32.totalorder %s312, 0
            // Predicated region
            $region90: #{taught_cross_attn.1} parent=77 // pred_check
              %p314 = pneg %p313
            $region91: #{taught_cross_attn.1} parent=77 // pred_check_branch
              %316 = sbr.rel (%p314) target = $region93
            $region92: #{taught_cross_attn.1} parent=77 // pred_region
              loop: start=0, step=1, limit=1
              $region94: #{taught_cross_attn.1} parent=92 // loop_pre_header
                _
              $region95: #{taught_cross_attn.1} parent=92 // loop_header
                %s318 = sphi 0, %s322
                %p319 = scmp.ge.s32.totalorder %s318, 1
                %s323 = sphi %s4, %s4
                %s324 = sphi [#allocation3], [#allocation3]
              $region96: #{taught_cross_attn.1} parent=92 // loop_header_branch
                %321 = sbr.rel (%p319) target = $region100
              $region97: #{taught_cross_attn.1} parent=92 // loop_body
                %v325 = vld [vmem:[%s323] sm:$0xff]
                %326 = vst [vmem:[%s324] sm:$0xff] %v325
                %v327 = vld [vmem:[%s323 + $0x8] sm:$0xff]
                %328 = vst [vmem:[%s324 + $0x8] sm:$0xff] %v327
                %v329 = vld [vmem:[%s323 + $0x10] sm:$0xff]
                %330 = vst [vmem:[%s324 + $0x10] sm:$0xff] %v329
                %v331 = vld [vmem:[%s323 + $0x18] sm:$0xff]
                %332 = vst [vmem:[%s324 + $0x18] sm:$0xff] %v331
              $region98: #{taught_cross_attn.1} parent=92 // loop_footer
                %s322 = sadd.s32 1, %s318
              $region99: #{taught_cross_attn.1} parent=92 // loop_footer_branch
                %317 = sbr.rel target = $region95
              $region100: #{taught_cross_attn.1} parent=92 // loop_exit
                _
            $region93: #{taught_cross_attn.1} parent=77 // pred_fallthru
              _
            %p333 = pneg %p313
            // Predicated region
            $region101: #{taught_cross_attn.1} parent=77 // pred_check
              _
            $region102: #{taught_cross_attn.1} parent=77 // pred_check_branch
              %335 = sbr.rel (%p313) target = $region104
            $region103: #{taught_cross_attn.1} parent=77 // pred_region
              %s336 = sand.u32 32, 7
            $region104: #{taught_cross_attn.1} parent=77 // pred_fallthru
              _
          $region78: #{taught_cross_attn.1} parent=39 // pred_fallthru
            _
          // Predicated region
          $region79: #{taught_cross_attn.1} parent=39 // pred_check
            %p298 = pneg %p294
          $region80: #{taught_cross_attn.1} parent=39 // pred_check_branch
            %300 = sbr.rel (%p298) target = $region82
          $region81: #{taught_cross_attn.1} parent=39 // pred_region
            %s301 = sshllo.u32 0, 32
            loop: start=0, step=1, limit=1
            $region83: #{taught_cross_attn.1} parent=81 // loop_pre_header
              _
            $region84: #{taught_cross_attn.1} parent=81 // loop_header
              %s303 = sphi 0, %s307
              %p304 = scmp.ge.s32.totalorder %s303, 1
              %s308 = sphi %s4, %s4
              %s309 = sphi [#allocation3], [#allocation3]
            $region85: #{taught_cross_attn.1} parent=81 // loop_header_branch
              %306 = sbr.rel (%p304) target = $region89
            $region86: #{taught_cross_attn.1} parent=81 // loop_body
              %v310 = vld [vmem:[%s308] sm:%s301]
              %311 = vst [vmem:[%s309] sm:%s301] %v310
            $region87: #{taught_cross_attn.1} parent=81 // loop_footer
              %s307 = sadd.s32 1, %s303
            $region88: #{taught_cross_attn.1} parent=81 // loop_footer_branch
              %302 = sbr.rel target = $region84
            $region89: #{taught_cross_attn.1} parent=81 // loop_exit
              _
          $region82: #{taught_cross_attn.1} parent=39 // pred_fallthru
            _
          // Predicated region
          $region105: #{taught_cross_attn.1} parent=39 // pred_check
            _
          $region106: #{taught_cross_attn.1} parent=39 // pred_check_branch
            %339 = sbr.rel (0) target = $region108
          $region107: #{taught_cross_attn.1} parent=39 // pred_region
            %340 = vsyncadd %s292, 512
          $region108: #{taught_cross_attn.1} parent=39 // pred_fallthru
            _
          %s341 = smul.u32 32, 1
          %s342 = sshll.u32 %s341, 4
          %343 = dma.done [#allocation6], %s342
          %v344 = vld [vmem:[%s231] sm:$0xff]
          %v345 = vld [vmem:[#allocation2] sm:$0xff]
          %v346 = vld [vmem:[#allocation2 + $0x8] sm:$0xff]
          %v347 = vld [vmem:[#allocation2 + $0x10] sm:$0xff]
          %v348 = vld [vmem:[#allocation2 + $0x18] sm:$0xff]
          %v349 = vld [vmem:[%s3] sm:$0x1]
          %v351 = vlaneseq
          %v352 = vshrl.u32 %v351, 7
          %v353 = vsub.s32 0, %v352
          %v354 = vrot.slane %v349, %v353
          %vm356 = vcmask 261120
          %v358 = vsel %vm356, %v344, 0
          %360 = vmatprep.subr.mxu0 0.0
          %361 = vmatpush1.msra.mxu0 %v345
          %362 = vmatprep.subr.mxu0 0.0
          %363 = vmatpush1.msra.mxu0 %v346
          %364 = vmatprep.subr.mxu0 0.0
          %365 = vmatpush1.msra.mxu0 %v347
          %366 = vmatprep.subr.mxu0 0.0
          %367 = vmatpush1.msra.mxu0 %v348
          %368 = vmatprep.subr.mxu0 0.0
          %369 = vmatpush1.msra.mxu0 0.0
          %370 = vmatprep.subr.mxu0 0.0
          %371 = vmatpush1.msra.mxu0 0.0
          %372 = vmatprep.subr.mxu0 0.0
          %373 = vmatpush1.msra.mxu0 0.0
          %374 = vmatprep.subr.mxu0 0.0
          %375 = vmatpush1.msra.mxu0 0.0
          %376 = vmatprep.subr.mxu0 0.0
          %377 = vmatpush1.msra.mxu0 0.0
          %378 = vmatprep.subr.mxu0 0.0
          %379 = vmatpush1.msra.mxu0 0.0
          %380 = vmatprep.subr.mxu0 0.0
          %381 = vmatpush1.msra.mxu0 0.0
          %382 = vmatprep.subr.mxu0 0.0
          %383 = vmatpush1.msra.mxu0 0.0
          %384 = vmatprep.subr.mxu0 0.0
          %385 = vmatpush1.msra.mxu0 0.0
          %386 = vmatprep.subr.mxu0 0.0
          %387 = vmatpush1.msra.mxu0 0.0
          %388 = vmatprep.subr.mxu0 0.0
          %389 = vmatpush1.msra.mxu0 0.0
          %390 = vmatprep.subr.mxu0 0.0
          %391 = vmatpush1.msra.mxu0 0.0
          %392 = vmatprep.subr.mxu0 0.0
          %393 = vmatpush1.msra.mxu0 0.0
          %394 = vmatprep.subr.mxu0 0.0
          %395 = vmatpush1.msra.mxu0 0.0
          %396 = vmatprep.subr.mxu0 0.0
          %397 = vmatpush1.msra.mxu0 0.0
          %398 = vmatprep.subr.mxu0 0.0
          %399 = vmatpush1.msra.mxu0 0.0
          %400 = vmatprep.subr.mxu0 0.0
          %401 = vmatpush1.msra.mxu0 0.0
          %402 = vmatprep.subr.mxu0 0.0
          %403 = vmatpush1.msra.mxu0 0.0
          %404 = vmatprep.subr.mxu0 0.0
          %405 = vmatpush1.msra.mxu0 0.0
          %406 = vmatprep.subr.mxu0 0.0
          %407 = vmatpush1.msra.mxu0 0.0
          %408 = vmatprep.subr.mxu0 0.0
          %409 = vmatpush1.msra.mxu0 0.0
          %410 = vmatprep.subr.mxu0 0.0
          %411 = vmatpush1.msra.mxu0 0.0
          %412 = vmatprep.subr.mxu0 0.0
          %413 = vmatpush1.msra.mxu0 0.0
          %414 = vmatprep.subr.mxu0 0.0
          %415 = vmatpush1.msra.mxu0 0.0
          %416 = vmatprep.subr.mxu0 0.0
          %417 = vmatpush1.msra.mxu0 0.0
          %418 = vmatprep.subr.mxu0 0.0
          %419 = vmatpush1.msra.mxu0 0.0
          %420 = vmatprep.subr.mxu0 0.0
          %421 = vmatpush1.msra.mxu0 0.0
          %422 = vmatprep.subr.mxu0 0.0
          %423 = vmatpush1.msra.mxu0 0.0
          %424 = vmatprep.mubr.f32.mxu0 0.0
          %425 = vmatmul.mubr.f32.gmra.mrb[0].mxu0 %v358
          %v426 = vpop.f32.mrb[0].mxu0
          %v427 = vadd.f32 %v354, %v426
          %v428 = vpop.f32.mrb[0].mxu0
          %429 = vdwg.mxu0
          %430 = vst.msk [vmem:[#allocation4] sm:$0xff] %vm356, %v427
          %s431 = sshll.u32 %s341, 4
          %432 = dma.done %s292, %s431
        $region40: #{taught_cross_attn.1} parent=35 // pred_fallthru
          _
        %v433 = vld [vmem:[%s239] sm:$0xff]
        %v434 = vld [vmem:[#allocation4] sm:$0xff]
        %vm435 = vcmask 64512
        %v437 = vsel %vm435, %v433, 0
        %439 = vmatprep.subr.mxu0 0.0
        %440 = vmatpush1.msra.mxu0 %v434
        %441 = vmatprep.subr.mxu0 0.0
        %442 = vmatpush1.msra.mxu0 0.0
        %443 = vmatprep.subr.mxu0 0.0
        %444 = vmatpush1.msra.mxu0 0.0
        %445 = vmatprep.subr.mxu0 0.0
        %446 = vmatpush1.msra.mxu0 0.0
        %447 = vmatprep.subr.mxu0 0.0
        %448 = vmatpush1.msra.mxu0 0.0
        %449 = vmatprep.subr.mxu0 0.0
        %450 = vmatpush1.msra.mxu0 0.0
        %451 = vmatprep.subr.mxu0 0.0
        %452 = vmatpush1.msra.mxu0 0.0
        %453 = vmatprep.subr.mxu0 0.0
        %454 = vmatpush1.msra.mxu0 0.0
        %455 = vmatprep.subr.mxu0 0.0
        %456 = vmatpush1.msra.mxu0 0.0
        %457 = vmatprep.subr.mxu0 0.0
        %458 = vmatpush1.msra.mxu0 0.0
        %459 = vmatprep.subr.mxu0 0.0
        %460 = vmatpush1.msra.mxu0 0.0
        %461 = vmatprep.subr.mxu0 0.0
        %462 = vmatpush1.msra.mxu0 0.0
        %463 = vmatprep.subr.mxu0 0.0
        %464 = vmatpush1.msra.mxu0 0.0
        %465 = vmatprep.subr.mxu0 0.0
        %466 = vmatpush1.msra.mxu0 0.0
        %467 = vmatprep.subr.mxu0 0.0
        %468 = vmatpush1.msra.mxu0 0.0
        %469 = vmatprep.subr.mxu0 0.0
        %470 = vmatpush1.msra.mxu0 0.0
        %471 = vmatprep.subr.mxu0 0.0
        %472 = vmatpush1.msra.mxu0 0.0
        %473 = vmatprep.subr.mxu0 0.0
        %474 = vmatpush1.msra.mxu0 0.0
        %475 = vmatprep.subr.mxu0 0.0
        %476 = vmatpush1.msra.mxu0 0.0
        %477 = vmatprep.subr.mxu0 0.0
        %478 = vmatpush1.msra.mxu0 0.0
        %479 = vmatprep.subr.mxu0 0.0
        %480 = vmatpush1.msra.mxu0 0.0
        %481 = vmatprep.subr.mxu0 0.0
        %482 = vmatpush1.msra.mxu0 0.0
        %483 = vmatprep.subr.mxu0 0.0
        %484 = vmatpush1.msra.mxu0 0.0
        %485 = vmatprep.subr.mxu0 0.0
        %486 = vmatpush1.msra.mxu0 0.0
        %487 = vmatprep.subr.mxu0 0.0
        %488 = vmatpush1.msra.mxu0 0.0
        %489 = vmatprep.subr.mxu0 0.0
        %490 = vmatpush1.msra.mxu0 0.0
        %491 = vmatprep.subr.mxu0 0.0
        %492 = vmatpush1.msra.mxu0 0.0
        %493 = vmatprep.subr.mxu0 0.0
        %494 = vmatpush1.msra.mxu0 0.0
        %495 = vmatprep.subr.mxu0 0.0
        %496 = vmatpush1.msra.mxu0 0.0
        %497 = vmatprep.subr.mxu0 0.0
        %498 = vmatpush1.msra.mxu0 0.0
        %499 = vmatprep.subr.mxu0 0.0
        %500 = vmatpush1.msra.mxu0 0.0
        %501 = vmatprep.subr.mxu0 0.0
        %502 = vmatpush1.msra.mxu0 0.0
        %503 = vmatprep.mubr.f32.mxu0 0.0
        %504 = vmatmul.mubr.f32.gmra.mrb[0].mxu0 %v437
        %v505 = vpop.f32.mrb[0].mxu0
        %v506 = vadd.f32 0.0, %v505
        %v507 = vpop.f32.mrb[0].mxu0
        %508 = vdwg.mxu0
        %vm509 = vcmask 31744
        %510 = vst.msk [vmem:[#allocation5] sm:$0xff] %vm509, %v506
        %s511 = scalar_lea.vmem %s239, 8
        %v512 = vld [vmem:[%s511] sm:$0xff]
        %v513 = vld [vmem:[#allocation4] sm:$0xff]
        %515 = vrot.lane.b32.xlu0 %v513, 124
        %v516 = vpop.permute.xlu0 %515
        %v519 = vsel %vm435, %v512, 0
        %521 = vmatprep.subr.mxu0 0.0
        %522 = vmatpush1.msra.mxu0 %v516
        %523 = vmatprep.subr.mxu0 0.0
        %524 = vmatpush1.msra.mxu0 0.0
        %525 = vmatprep.subr.mxu0 0.0
        %526 = vmatpush1.msra.mxu0 0.0
        %527 = vmatprep.subr.mxu0 0.0
        %528 = vmatpush1.msra.mxu0 0.0
        %529 = vmatprep.subr.mxu0 0.0
        %530 = vmatpush1.msra.mxu0 0.0
        %531 = vmatprep.subr.mxu0 0.0
        %532 = vmatpush1.msra.mxu0 0.0
        %533 = vmatprep.subr.mxu0 0.0
        %534 = vmatpush1.msra.mxu0 0.0
        %535 = vmatprep.subr.mxu0 0.0
        %536 = vmatpush1.msra.mxu0 0.0
        %537 = vmatprep.subr.mxu0 0.0
        %538 = vmatpush1.msra.mxu0 0.0
        %539 = vmatprep.subr.mxu0 0.0
        %540 = vmatpush1.msra.mxu0 0.0
        %541 = vmatprep.subr.mxu0 0.0
        %542 = vmatpush1.msra.mxu0 0.0
        %543 = vmatprep.subr.mxu0 0.0
        %544 = vmatpush1.msra.mxu0 0.0
        %545 = vmatprep.subr.mxu0 0.0
        %546 = vmatpush1.msra.mxu0 0.0
        %547 = vmatprep.subr.mxu0 0.0
        %548 = vmatpush1.msra.mxu0 0.0
        %549 = vmatprep.subr.mxu0 0.0
        %550 = vmatpush1.msra.mxu0 0.0
        %551 = vmatprep.subr.mxu0 0.0
        %552 = vmatpush1.msra.mxu0 0.0
        %553 = vmatprep.subr.mxu0 0.0
        %554 = vmatpush1.msra.mxu0 0.0
        %555 = vmatprep.subr.mxu0 0.0
        %556 = vmatpush1.msra.mxu0 0.0
        %557 = vmatprep.subr.mxu0 0.0
        %558 = vmatpush1.msra.mxu0 0.0
        %559 = vmatprep.subr.mxu0 0.0
        %560 = vmatpush1.msra.mxu0 0.0
        %561 = vmatprep.subr.mxu0 0.0
        %562 = vmatpush1.msra.mxu0 0.0
        %563 = vmatprep.subr.mxu0 0.0
        %564 = vmatpush1.msra.mxu0 0.0
        %565 = vmatprep.subr.mxu0 0.0
        %566 = vmatpush1.msra.mxu0 0.0
        %567 = vmatprep.subr.mxu0 0.0
        %568 = vmatpush1.msra.mxu0 0.0
        %569 = vmatprep.subr.mxu0 0.0
        %570 = vmatpush1.msra.mxu0 0.0
        %571 = vmatprep.subr.mxu0 0.0
        %572 = vmatpush1.msra.mxu0 0.0
        %573 = vmatprep.subr.mxu0 0.0
        %574 = vmatpush1.msra.mxu0 0.0
        %575 = vmatprep.subr.mxu0 0.0
        %576 = vmatpush1.msra.mxu0 0.0
        %577 = vmatprep.subr.mxu0 0.0
        %578 = vmatpush1.msra.mxu0 0.0
        %579 = vmatprep.subr.mxu0 0.0
        %580 = vmatpush1.msra.mxu0 0.0
        %581 = vmatprep.subr.mxu0 0.0
        %582 = vmatpush1.msra.mxu0 0.0
        %583 = vmatprep.subr.mxu0 0.0
        %584 = vmatpush1.msra.mxu0 0.0
        %585 = vmatprep.mubr.f32.mxu0 0.0
        %586 = vmatmul.mubr.f32.gmra.mrb[0].mxu0 %v519
        %v587 = vpop.f32.mrb[0].mxu0
        %v588 = vadd.f32 0.0, %v587
        %v589 = vpop.f32.mrb[0].mxu0
        %590 = vdwg.mxu0
        %592 = vrot.lane.b32.xlu0 %v588, 4
        %v593 = vpop.permute.xlu0 %592
        %vm595 = vcmask 64544
        %596 = vst.msk [vmem:[#allocation5] sm:$0xff] %vm595, %v593
        %s597 = scalar_lea.vmem %s239, 16
        %v598 = vld [vmem:[%s597] sm:$0xff]
        %v599 = vld [vmem:[#allocation4] sm:$0xff]
        %601 = vrot.lane.b32.xlu0 %v599, 120
        %v602 = vpop.permute.xlu0 %601
        %v605 = vsel %vm435, %v598, 0
        %607 = vmatprep.subr.mxu0 0.0
        %608 = vmatpush1.msra.mxu0 %v602
        %609 = vmatprep.subr.mxu0 0.0
        %610 = vmatpush1.msra.mxu0 0.0
        %611 = vmatprep.subr.mxu0 0.0
        %612 = vmatpush1.msra.mxu0 0.0
        %613 = vmatprep.subr.mxu0 0.0
        %614 = vmatpush1.msra.mxu0 0.0
        %615 = vmatprep.subr.mxu0 0.0
        %616 = vmatpush1.msra.mxu0 0.0
        %617 = vmatprep.subr.mxu0 0.0
        %618 = vmatpush1.msra.mxu0 0.0
        %619 = vmatprep.subr.mxu0 0.0
        %620 = vmatpush1.msra.mxu0 0.0
        %621 = vmatprep.subr.mxu0 0.0
        %622 = vmatpush1.msra.mxu0 0.0
        %623 = vmatprep.subr.mxu0 0.0
        %624 = vmatpush1.msra.mxu0 0.0
        %625 = vmatprep.subr.mxu0 0.0
        %626 = vmatpush1.msra.mxu0 0.0
        %627 = vmatprep.subr.mxu0 0.0
        %628 = vmatpush1.msra.mxu0 0.0
        %629 = vmatprep.subr.mxu0 0.0
        %630 = vmatpush1.msra.mxu0 0.0
        %631 = vmatprep.subr.mxu0 0.0
        %632 = vmatpush1.msra.mxu0 0.0
        %633 = vmatprep.subr.mxu0 0.0
        %634 = vmatpush1.msra.mxu0 0.0
        %635 = vmatprep.subr.mxu0 0.0
        %636 = vmatpush1.msra.mxu0 0.0
        %637 = vmatprep.subr.mxu0 0.0
        %638 = vmatpush1.msra.mxu0 0.0
        %639 = vmatprep.subr.mxu0 0.0
        %640 = vmatpush1.msra.mxu0 0.0
        %641 = vmatprep.subr.mxu0 0.0
        %642 = vmatpush1.msra.mxu0 0.0
        %643 = vmatprep.subr.mxu0 0.0
        %644 = vmatpush1.msra.mxu0 0.0
        %645 = vmatprep.subr.mxu0 0.0
        %646 = vmatpush1.msra.mxu0 0.0
        %647 = vmatprep.subr.mxu0 0.0
        %648 = vmatpush1.msra.mxu0 0.0
        %649 = vmatprep.subr.mxu0 0.0
        %650 = vmatpush1.msra.mxu0 0.0
        %651 = vmatprep.subr.mxu0 0.0
        %652 = vmatpush1.msra.mxu0 0.0
        %653 = vmatprep.subr.mxu0 0.0
        %654 = vmatpush1.msra.mxu0 0.0
        %655 = vmatprep.subr.mxu0 0.0
        %656 = vmatpush1.msra.mxu0 0.0
        %657 = vmatprep.subr.mxu0 0.0
        %658 = vmatpush1.msra.mxu0 0.0
        %659 = vmatprep.subr.mxu0 0.0
        %660 = vmatpush1.msra.mxu0 0.0
        %661 = vmatprep.subr.mxu0 0.0
        %662 = vmatpush1.msra.mxu0 0.0
        %663 = vmatprep.subr.mxu0 0.0
        %664 = vmatpush1.msra.mxu0 0.0
        %665 = vmatprep.subr.mxu0 0.0
        %666 = vmatpush1.msra.mxu0 0.0
        %667 = vmatprep.subr.mxu0 0.0
        %668 = vmatpush1.msra.mxu0 0.0
        %669 = vmatprep.subr.mxu0 0.0
        %670 = vmatpush1.msra.mxu0 0.0
        %671 = vmatprep.mubr.f32.mxu0 0.0
        %672 = vmatmul.mubr.f32.gmra.mrb[0].mxu0 %v605
        %v673 = vpop.f32.mrb[0].mxu0
        %v674 = vadd.f32 0.0, %v673
        %v675 = vpop.f32.mrb[0].mxu0
        %676 = vdwg.mxu0
        %678 = vrot.lane.b32.xlu0 %v674, 8
        %v679 = vpop.permute.xlu0 %678
        %vm681 = vcmask 97344
        %682 = vst.msk [vmem:[#allocation5] sm:$0xff] %vm681, %v679
        %s683 = scalar_lea.vmem %s239, 24
        %v684 = vld [vmem:[%s683] sm:$0xff]
        %v685 = vld [vmem:[#allocation4] sm:$0xff]
        %687 = vrot.lane.b32.xlu0 %v685, 116
        %v688 = vpop.permute.xlu0 %687
        %v691 = vsel %vm435, %v684, 0
        %693 = vmatprep.subr.mxu0 0.0
        %694 = vmatpush1.msra.mxu0 %v688
        %695 = vmatprep.subr.mxu0 0.0
        %696 = vmatpush1.msra.mxu0 0.0
        %697 = vmatprep.subr.mxu0 0.0
        %698 = vmatpush1.msra.mxu0 0.0
        %699 = vmatprep.subr.mxu0 0.0
        %700 = vmatpush1.msra.mxu0 0.0
        %701 = vmatprep.subr.mxu0 0.0
        %702 = vmatpush1.msra.mxu0 0.0
        %703 = vmatprep.subr.mxu0 0.0
        %704 = vmatpush1.msra.mxu0 0.0
        %705 = vmatprep.subr.mxu0 0.0
        %706 = vmatpush1.msra.mxu0 0.0
        %707 = vmatprep.subr.mxu0 0.0
        %708 = vmatpush1.msra.mxu0 0.0
        %709 = vmatprep.subr.mxu0 0.0
        %710 = vmatpush1.msra.mxu0 0.0
        %711 = vmatprep.subr.mxu0 0.0
        %712 = vmatpush1.msra.mxu0 0.0
        %713 = vmatprep.subr.mxu0 0.0
        %714 = vmatpush1.msra.mxu0 0.0
        %715 = vmatprep.subr.mxu0 0.0
        %716 = vmatpush1.msra.mxu0 0.0
        %717 = vmatprep.subr.mxu0 0.0
        %718 = vmatpush1.msra.mxu0 0.0
        %719 = vmatprep.subr.mxu0 0.0
        %720 = vmatpush1.msra.mxu0 0.0
        %721 = vmatprep.subr.mxu0 0.0
        %722 = vmatpush1.msra.mxu0 0.0
        %723 = vmatprep.subr.mxu0 0.0
        %724 = vmatpush1.msra.mxu0 0.0
        %725 = vmatprep.subr.mxu0 0.0
        %726 = vmatpush1.msra.mxu0 0.0
        %727 = vmatprep.subr.mxu0 0.0
        %728 = vmatpush1.msra.mxu0 0.0
        %729 = vmatprep.subr.mxu0 0.0
        %730 = vmatpush1.msra.mxu0 0.0
        %731 = vmatprep.subr.mxu0 0.0
        %732 = vmatpush1.msra.mxu0 0.0
        %733 = vmatprep.subr.mxu0 0.0
        %734 = vmatpush1.msra.mxu0 0.0
        %735 = vmatprep.subr.mxu0 0.0
        %736 = vmatpush1.msra.mxu0 0.0
        %737 = vmatprep.subr.mxu0 0.0
        %738 = vmatpush1.msra.mxu0 0.0
        %739 = vmatprep.subr.mxu0 0.0
        %740 = vmatpush1.msra.mxu0 0.0
        %741 = vmatprep.subr.mxu0 0.0
        %742 = vmatpush1.msra.mxu0 0.0
        %743 = vmatprep.subr.mxu0 0.0
        %744 = vmatpush1.msra.mxu0 0.0
        %745 = vmatprep.subr.mxu0 0.0
        %746 = vmatpush1.msra.mxu0 0.0
        %747 = vmatprep.subr.mxu0 0.0
        %748 = vmatpush1.msra.mxu0 0.0
        %749 = vmatprep.subr.mxu0 0.0
        %750 = vmatpush1.msra.mxu0 0.0
        %751 = vmatprep.subr.mxu0 0.0
        %752 = vmatpush1.msra.mxu0 0.0
        %753 = vmatprep.subr.mxu0 0.0
        %754 = vmatpush1.msra.mxu0 0.0
        %755 = vmatprep.subr.mxu0 0.0
        %756 = vmatpush1.msra.mxu0 0.0
        %757 = vmatprep.mubr.f32.mxu0 0.0
        %758 = vmatmul.mubr.f32.gmra.mrb[0].mxu0 %v691
        %v759 = vpop.f32.mrb[0].mxu0
        %v760 = vadd.f32 0.0, %v759
        %v761 = vpop.f32.mrb[0].mxu0
        %762 = vdwg.mxu0
        %764 = vrot.lane.b32.xlu0 %v760, 12
        %v765 = vpop.permute.xlu0 %764
        %vm767 = vcmask 130144
        %768 = vst.msk [vmem:[#allocation5] sm:$0xff] %vm767, %v765
        %s769 = scalar_lea.vmem %s239, 32
        %v770 = vld [vmem:[%s769] sm:$0xff]
        %v771 = vld [vmem:[#allocation4] sm:$0xff]
        %773 = vrot.lane.b32.xlu0 %v771, 112
        %v774 = vpop.permute.xlu0 %773
        %v777 = vsel %vm435, %v770, 0
        %779 = vmatprep.subr.mxu0 0.0
        %780 = vmatpush1.msra.mxu0 %v774
        %781 = vmatprep.subr.mxu0 0.0
        %782 = vmatpush1.msra.mxu0 0.0
        %783 = vmatprep.subr.mxu0 0.0
        %784 = vmatpush1.msra.mxu0 0.0
        %785 = vmatprep.subr.mxu0 0.0
        %786 = vmatpush1.msra.mxu0 0.0
        %787 = vmatprep.subr.mxu0 0.0
        %788 = vmatpush1.msra.mxu0 0.0
        %789 = vmatprep.subr.mxu0 0.0
        %790 = vmatpush1.msra.mxu0 0.0
        %791 = vmatprep.subr.mxu0 0.0
        %792 = vmatpush1.msra.mxu0 0.0
        %793 = vmatprep.subr.mxu0 0.0
        %794 = vmatpush1.msra.mxu0 0.0
        %795 = vmatprep.subr.mxu0 0.0
        %796 = vmatpush1.msra.mxu0 0.0
        %797 = vmatprep.subr.mxu0 0.0
        %798 = vmatpush1.msra.mxu0 0.0
        %799 = vmatprep.subr.mxu0 0.0
        %800 = vmatpush1.msra.mxu0 0.0
        %801 = vmatprep.subr.mxu0 0.0
        %802 = vmatpush1.msra.mxu0 0.0
        %803 = vmatprep.subr.mxu0 0.0
        %804 = vmatpush1.msra.mxu0 0.0
        %805 = vmatprep.subr.mxu0 0.0
        %806 = vmatpush1.msra.mxu0 0.0
        %807 = vmatprep.subr.mxu0 0.0
        %808 = vmatpush1.msra.mxu0 0.0
        %809 = vmatprep.subr.mxu0 0.0
        %810 = vmatpush1.msra.mxu0 0.0
        %811 = vmatprep.subr.mxu0 0.0
        %812 = vmatpush1.msra.mxu0 0.0
        %813 = vmatprep.subr.mxu0 0.0
        %814 = vmatpush1.msra.mxu0 0.0
        %815 = vmatprep.subr.mxu0 0.0
        %816 = vmatpush1.msra.mxu0 0.0
        %817 = vmatprep.subr.mxu0 0.0
        %818 = vmatpush1.msra.mxu0 0.0
        %819 = vmatprep.subr.mxu0 0.0
        %820 = vmatpush1.msra.mxu0 0.0
        %821 = vmatprep.subr.mxu0 0.0
        %822 = vmatpush1.msra.mxu0 0.0
        %823 = vmatprep.subr.mxu0 0.0
        %824 = vmatpush1.msra.mxu0 0.0
        %825 = vmatprep.subr.mxu0 0.0
        %826 = vmatpush1.msra.mxu0 0.0
        %827 = vmatprep.subr.mxu0 0.0
        %828 = vmatpush1.msra.mxu0 0.0
        %829 = vmatprep.subr.mxu0 0.0
        %830 = vmatpush1.msra.mxu0 0.0
        %831 = vmatprep.subr.mxu0 0.0
        %832 = vmatpush1.msra.mxu0 0.0
        %833 = vmatprep.subr.mxu0 0.0
        %834 = vmatpush1.msra.mxu0 0.0
        %835 = vmatprep.subr.mxu0 0.0
        %836 = vmatpush1.msra.mxu0 0.0
        %837 = vmatprep.subr.mxu0 0.0
        %838 = vmatpush1.msra.mxu0 0.0
        %839 = vmatprep.subr.mxu0 0.0
        %840 = vmatpush1.msra.mxu0 0.0
        %841 = vmatprep.subr.mxu0 0.0
        %842 = vmatpush1.msra.mxu0 0.0
        %843 = vmatprep.mubr.f32.mxu0 0.0
        %844 = vmatmul.mubr.f32.gmra.mrb[0].mxu0 %v777
        %v845 = vpop.f32.mrb[0].mxu0
        %v846 = vadd.f32 0.0, %v845
        %v847 = vpop.f32.mrb[0].mxu0
        %848 = vdwg.mxu0
        %850 = vrot.lane.b32.xlu0 %v846, 16
        %v851 = vpop.permute.xlu0 %850
        %vm853 = vcmask 162944
        %854 = vst.msk [vmem:[#allocation5] sm:$0xff] %vm853, %v851
        %s855 = scalar_lea.vmem %s239, 40
        %v856 = vld [vmem:[%s855] sm:$0xff]
        %v857 = vld [vmem:[#allocation4] sm:$0xff]
        %859 = vrot.lane.b32.xlu0 %v857, 108
        %v860 = vpop.permute.xlu0 %859
        %v863 = vsel %vm435, %v856, 0
        %865 = vmatprep.subr.mxu0 0.0
        %866 = vmatpush1.msra.mxu0 %v860
        %867 = vmatprep.subr.mxu0 0.0
        %868 = vmatpush1.msra.mxu0 0.0
        %869 = vmatprep.subr.mxu0 0.0
        %870 = vmatpush1.msra.mxu0 0.0
        %871 = vmatprep.subr.mxu0 0.0
        %872 = vmatpush1.msra.mxu0 0.0
        %873 = vmatprep.subr.mxu0 0.0
        %874 = vmatpush1.msra.mxu0 0.0
        %875 = vmatprep.subr.mxu0 0.0
        %876 = vmatpush1.msra.mxu0 0.0
        %877 = vmatprep.subr.mxu0 0.0
        %878 = vmatpush1.msra.mxu0 0.0
        %879 = vmatprep.subr.mxu0 0.0
        %880 = vmatpush1.msra.mxu0 0.0
        %881 = vmatprep.subr.mxu0 0.0
        %882 = vmatpush1.msra.mxu0 0.0
        %883 = vmatprep.subr.mxu0 0.0
        %884 = vmatpush1.msra.mxu0 0.0
        %885 = vmatprep.subr.mxu0 0.0
        %886 = vmatpush1.msra.mxu0 0.0
        %887 = vmatprep.subr.mxu0 0.0
        %888 = vmatpush1.msra.mxu0 0.0
        %889 = vmatprep.subr.mxu0 0.0
        %890 = vmatpush1.msra.mxu0 0.0
        %891 = vmatprep.subr.mxu0 0.0
        %892 = vmatpush1.msra.mxu0 0.0
        %893 = vmatprep.subr.mxu0 0.0
        %894 = vmatpush1.msra.mxu0 0.0
        %895 = vmatprep.subr.mxu0 0.0
        %896 = vmatpush1.msra.mxu0 0.0
        %897 = vmatprep.subr.mxu0 0.0
        %898 = vmatpush1.msra.mxu0 0.0
        %899 = vmatprep.subr.mxu0 0.0
        %900 = vmatpush1.msra.mxu0 0.0
        %901 = vmatprep.subr.mxu0 0.0
        %902 = vmatpush1.msra.mxu0 0.0
        %903 = vmatprep.subr.mxu0 0.0
        %904 = vmatpush1.msra.mxu0 0.0
        %905 = vmatprep.subr.mxu0 0.0
        %906 = vmatpush1.msra.mxu0 0.0
        %907 = vmatprep.subr.mxu0 0.0
        %908 = vmatpush1.msra.mxu0 0.0
        %909 = vmatprep.subr.mxu0 0.0
        %910 = vmatpush1.msra.mxu0 0.0
        %911 = vmatprep.subr.mxu0 0.0
        %912 = vmatpush1.msra.mxu0 0.0
        %913 = vmatprep.subr.mxu0 0.0
        %914 = vmatpush1.msra.mxu0 0.0
        %915 = vmatprep.subr.mxu0 0.0
        %916 = vmatpush1.msra.mxu0 0.0
        %917 = vmatprep.subr.mxu0 0.0
        %918 = vmatpush1.msra.mxu0 0.0
        %919 = vmatprep.subr.mxu0 0.0
        %920 = vmatpush1.msra.mxu0 0.0
        %921 = vmatprep.subr.mxu0 0.0
        %922 = vmatpush1.msra.mxu0 0.0
        %923 = vmatprep.subr.mxu0 0.0
        %924 = vmatpush1.msra.mxu0 0.0
        %925 = vmatprep.subr.mxu0 0.0
        %926 = vmatpush1.msra.mxu0 0.0
        %927 = vmatprep.subr.mxu0 0.0
        %928 = vmatpush1.msra.mxu0 0.0
        %929 = vmatprep.mubr.f32.mxu0 0.0
        %930 = vmatmul.mubr.f32.gmra.mrb[0].mxu0 %v863
        %v931 = vpop.f32.mrb[0].mxu0
        %v932 = vadd.f32 0.0, %v931
        %v933 = vpop.f32.mrb[0].mxu0
        %934 = vdwg.mxu0
        %936 = vrot.lane.b32.xlu0 %v932, 20
        %v937 = vpop.permute.xlu0 %936
        %vm939 = vcmask 195744
        %940 = vst.msk [vmem:[#allocation5] sm:$0xff] %vm939, %v937
        %s941 = scalar_lea.vmem %s239, 48
        %v942 = vld [vmem:[%s941] sm:$0xff]
        %v943 = vld [vmem:[#allocation4] sm:$0xff]
        %945 = vrot.lane.b32.xlu0 %v943, 104
        %v946 = vpop.permute.xlu0 %945
        %v949 = vsel %vm435, %v942, 0
        %951 = vmatprep.subr.mxu0 0.0
        %952 = vmatpush1.msra.mxu0 %v946
        %953 = vmatprep.subr.mxu0 0.0
        %954 = vmatpush1.msra.mxu0 0.0
        %955 = vmatprep.subr.mxu0 0.0
        %956 = vmatpush1.msra.mxu0 0.0
        %957 = vmatprep.subr.mxu0 0.0
        %958 = vmatpush1.msra.mxu0 0.0
        %959 = vmatprep.subr.mxu0 0.0
        %960 = vmatpush1.msra.mxu0 0.0
        %961 = vmatprep.subr.mxu0 0.0
        %962 = vmatpush1.msra.mxu0 0.0
        %963 = vmatprep.subr.mxu0 0.0
        %964 = vmatpush1.msra.mxu0 0.0
        %965 = vmatprep.subr.mxu0 0.0
        %966 = vmatpush1.msra.mxu0 0.0
        %967 = vmatprep.subr.mxu0 0.0
        %968 = vmatpush1.msra.mxu0 0.0
        %969 = vmatprep.subr.mxu0 0.0
        %970 = vmatpush1.msra.mxu0 0.0
        %971 = vmatprep.subr.mxu0 0.0
        %972 = vmatpush1.msra.mxu0 0.0
        %973 = vmatprep.subr.mxu0 0.0
        %974 = vmatpush1.msra.mxu0 0.0
        %975 = vmatprep.subr.mxu0 0.0
        %976 = vmatpush1.msra.mxu0 0.0
        %977 = vmatprep.subr.mxu0 0.0
        %978 = vmatpush1.msra.mxu0 0.0
        %979 = vmatprep.subr.mxu0 0.0
        %980 = vmatpush1.msra.mxu0 0.0
        %981 = vmatprep.subr.mxu0 0.0
        %982 = vmatpush1.msra.mxu0 0.0
        %983 = vmatprep.subr.mxu0 0.0
        %984 = vmatpush1.msra.mxu0 0.0
        %985 = vmatprep.subr.mxu0 0.0
        %986 = vmatpush1.msra.mxu0 0.0
        %987 = vmatprep.subr.mxu0 0.0
        %988 = vmatpush1.msra.mxu0 0.0
        %989 = vmatprep.subr.mxu0 0.0
        %990 = vmatpush1.msra.mxu0 0.0
        %991 = vmatprep.subr.mxu0 0.0
        %992 = vmatpush1.msra.mxu0 0.0
        %993 = vmatprep.subr.mxu0 0.0
        %994 = vmatpush1.msra.mxu0 0.0
        %995 = vmatprep.subr.mxu0 0.0
        %996 = vmatpush1.msra.mxu0 0.0
        %997 = vmatprep.subr.mxu0 0.0
        %998 = vmatpush1.msra.mxu0 0.0
        %999 = vmatprep.subr.mxu0 0.0
        %1000 = vmatpush1.msra.mxu0 0.0
        %1001 = vmatprep.subr.mxu0 0.0
        %1002 = vmatpush1.msra.mxu0 0.0
        %1003 = vmatprep.subr.mxu0 0.0
        %1004 = vmatpush1.msra.mxu0 0.0
        %1005 = vmatprep.subr.mxu0 0.0
        %1006 = vmatpush1.msra.mxu0 0.0
        %1007 = vmatprep.subr.mxu0 0.0
        %1008 = vmatpush1.msra.mxu0 0.0
        %1009 = vmatprep.subr.mxu0 0.0
        %1010 = vmatpush1.msra.mxu0 0.0
        %1011 = vmatprep.subr.mxu0 0.0
        %1012 = vmatpush1.msra.mxu0 0.0
        %1013 = vmatprep.subr.mxu0 0.0
        %1014 = vmatpush1.msra.mxu0 0.0
        %1015 = vmatprep.mubr.f32.mxu0 0.0
        %1016 = vmatmul.mubr.f32.gmra.mrb[0].mxu0 %v949
        %v1017 = vpop.f32.mrb[0].mxu0
        %v1018 = vadd.f32 0.0, %v1017
        %v1019 = vpop.f32.mrb[0].mxu0
        %1020 = vdwg.mxu0
        %1022 = vrot.lane.b32.xlu0 %v1018, 24
        %v1023 = vpop.permute.xlu0 %1022
        %vm1025 = vcmask 228544
        %1026 = vst.msk [vmem:[#allocation5] sm:$0xff] %vm1025, %v1023
        %s1027 = scalar_lea.vmem %s239, 56
        %v1028 = vld [vmem:[%s1027] sm:$0xff]
        %v1029 = vld [vmem:[#allocation4] sm:$0xff]
        %1031 = vrot.lane.b32.xlu0 %v1029, 100
        %v1032 = vpop.permute.xlu0 %1031
        %v1035 = vsel %vm435, %v1028, 0
        %1037 = vmatprep.subr.mxu0 0.0
        %1038 = vmatpush1.msra.mxu0 %v1032
        %1039 = vmatprep.subr.mxu0 0.0
        %1040 = vmatpush1.msra.mxu0 0.0
        %1041 = vmatprep.subr.mxu0 0.0
        %1042 = vmatpush1.msra.mxu0 0.0
        %1043 = vmatprep.subr.mxu0 0.0
        %1044 = vmatpush1.msra.mxu0 0.0
        %1045 = vmatprep.subr.mxu0 0.0
        %1046 = vmatpush1.msra.mxu0 0.0
        %1047 = vmatprep.subr.mxu0 0.0
        %1048 = vmatpush1.msra.mxu0 0.0
        %1049 = vmatprep.subr.mxu0 0.0
        %1050 = vmatpush1.msra.mxu0 0.0
        %1051 = vmatprep.subr.mxu0 0.0
        %1052 = vmatpush1.msra.mxu0 0.0
        %1053 = vmatprep.subr.mxu0 0.0
        %1054 = vmatpush1.msra.mxu0 0.0
        %1055 = vmatprep.subr.mxu0 0.0
        %1056 = vmatpush1.msra.mxu0 0.0
        %1057 = vmatprep.subr.mxu0 0.0
        %1058 = vmatpush1.msra.mxu0 0.0
        %1059 = vmatprep.subr.mxu0 0.0
        %1060 = vmatpush1.msra.mxu0 0.0
        %1061 = vmatprep.subr.mxu0 0.0
        %1062 = vmatpush1.msra.mxu0 0.0
        %1063 = vmatprep.subr.mxu0 0.0
        %1064 = vmatpush1.msra.mxu0 0.0
        %1065 = vmatprep.subr.mxu0 0.0
        %1066 = vmatpush1.msra.mxu0 0.0
        %1067 = vmatprep.subr.mxu0 0.0
        %1068 = vmatpush1.msra.mxu0 0.0
        %1069 = vmatprep.subr.mxu0 0.0
        %1070 = vmatpush1.msra.mxu0 0.0
        %1071 = vmatprep.subr.mxu0 0.0
        %1072 = vmatpush1.msra.mxu0 0.0
        %1073 = vmatprep.subr.mxu0 0.0
        %1074 = vmatpush1.msra.mxu0 0.0
        %1075 = vmatprep.subr.mxu0 0.0
        %1076 = vmatpush1.msra.mxu0 0.0
        %1077 = vmatprep.subr.mxu0 0.0
        %1078 = vmatpush1.msra.mxu0 0.0
        %1079 = vmatprep.subr.mxu0 0.0
        %1080 = vmatpush1.msra.mxu0 0.0
        %1081 = vmatprep.subr.mxu0 0.0
        %1082 = vmatpush1.msra.mxu0 0.0
        %1083 = vmatprep.subr.mxu0 0.0
        %1084 = vmatpush1.msra.mxu0 0.0
        %1085 = vmatprep.subr.mxu0 0.0
        %1086 = vmatpush1.msra.mxu0 0.0
        %1087 = vmatprep.subr.mxu0 0.0
        %1088 = vmatpush1.msra.mxu0 0.0
        %1089 = vmatprep.subr.mxu0 0.0
        %1090 = vmatpush1.msra.mxu0 0.0
        %1091 = vmatprep.subr.mxu0 0.0
        %1092 = vmatpush1.msra.mxu0 0.0
        %1093 = vmatprep.subr.mxu0 0.0
        %1094 = vmatpush1.msra.mxu0 0.0
        %1095 = vmatprep.subr.mxu0 0.0
        %1096 = vmatpush1.msra.mxu0 0.0
        %1097 = vmatprep.subr.mxu0 0.0
        %1098 = vmatpush1.msra.mxu0 0.0
        %1099 = vmatprep.subr.mxu0 0.0
        %1100 = vmatpush1.msra.mxu0 0.0
        %1101 = vmatprep.mubr.f32.mxu0 0.0
        %1102 = vmatmul.mubr.f32.gmra.mrb[0].mxu0 %v1035
        %v1103 = vpop.f32.mrb[0].mxu0
        %v1104 = vadd.f32 0.0, %v1103
        %v1105 = vpop.f32.mrb[0].mxu0
        %1106 = vdwg.mxu0
        %1108 = vrot.lane.b32.xlu0 %v1104, 28
        %v1109 = vpop.permute.xlu0 %1108
        %vm1111 = vcmask 261344
        %1112 = vst.msk [vmem:[#allocation5] sm:$0xff] %vm1111, %v1109
        %v1113 = vld [vmem:[#allocation5] sm:$0xff]
        %v1114 = vld [vmem:[#allocation3] sm:$0xff]
        %v1115 = vld [vmem:[#allocation3 + $0x8] sm:$0xff]
        %v1116 = vld [vmem:[#allocation3 + $0x10] sm:$0xff]
        %v1117 = vld [vmem:[#allocation3 + $0x18] sm:$0xff]
        %v1118 = vld [vmem:[%s5] sm:$0x1]
        %v1120 = vlaneseq
        %v1121 = vshrl.u32 %v1120, 7
        %v1122 = vsub.s32 0, %v1121
        %v1123 = vrot.slane %v1118, %v1122
        %vm1125 = vcmask 261120
        %v1127 = vsel %vm1125, %v1113, 0
        %1129 = vmatprep.subr.mxu0 0.0
        %1130 = vmatpush1.msra.mxu0 %v1114
        %1131 = vmatprep.subr.mxu0 0.0
        %1132 = vmatpush1.msra.mxu0 %v1115
        %1133 = vmatprep.subr.mxu0 0.0
        %1134 = vmatpush1.msra.mxu0 %v1116
        %1135 = vmatprep.subr.mxu0 0.0
        %1136 = vmatpush1.msra.mxu0 %v1117
        %1137 = vmatprep.subr.mxu0 0.0
        %1138 = vmatpush1.msra.mxu0 0.0
        %1139 = vmatprep.subr.mxu0 0.0
        %1140 = vmatpush1.msra.mxu0 0.0
        %1141 = vmatprep.subr.mxu0 0.0
        %1142 = vmatpush1.msra.mxu0 0.0
        %1143 = vmatprep.subr.mxu0 0.0
        %1144 = vmatpush1.msra.mxu0 0.0
        %1145 = vmatprep.subr.mxu0 0.0
        %1146 = vmatpush1.msra.mxu0 0.0
        %1147 = vmatprep.subr.mxu0 0.0
        %1148 = vmatpush1.msra.mxu0 0.0
        %1149 = vmatprep.subr.mxu0 0.0
        %1150 = vmatpush1.msra.mxu0 0.0
        %1151 = vmatprep.subr.mxu0 0.0
        %1152 = vmatpush1.msra.mxu0 0.0
        %1153 = vmatprep.subr.mxu0 0.0
        %1154 = vmatpush1.msra.mxu0 0.0
        %1155 = vmatprep.subr.mxu0 0.0
        %1156 = vmatpush1.msra.mxu0 0.0
        %1157 = vmatprep.subr.mxu0 0.0
        %1158 = vmatpush1.msra.mxu0 0.0
        %1159 = vmatprep.subr.mxu0 0.0
        %1160 = vmatpush1.msra.mxu0 0.0
        %1161 = vmatprep.subr.mxu0 0.0
        %1162 = vmatpush1.msra.mxu0 0.0
        %1163 = vmatprep.subr.mxu0 0.0
        %1164 = vmatpush1.msra.mxu0 0.0
        %1165 = vmatprep.subr.mxu0 0.0
        %1166 = vmatpush1.msra.mxu0 0.0
        %1167 = vmatprep.subr.mxu0 0.0
        %1168 = vmatpush1.msra.mxu0 0.0
        %1169 = vmatprep.subr.mxu0 0.0
        %1170 = vmatpush1.msra.mxu0 0.0
        %1171 = vmatprep.subr.mxu0 0.0
        %1172 = vmatpush1.msra.mxu0 0.0
        %1173 = vmatprep.subr.mxu0 0.0
        %1174 = vmatpush1.msra.mxu0 0.0
        %1175 = vmatprep.subr.mxu0 0.0
        %1176 = vmatpush1.msra.mxu0 0.0
        %1177 = vmatprep.subr.mxu0 0.0
        %1178 = vmatpush1.msra.mxu0 0.0
        %1179 = vmatprep.subr.mxu0 0.0
        %1180 = vmatpush1.msra.mxu0 0.0
        %1181 = vmatprep.subr.mxu0 0.0
        %1182 = vmatpush1.msra.mxu0 0.0
        %1183 = vmatprep.subr.mxu0 0.0
        %1184 = vmatpush1.msra.mxu0 0.0
        %1185 = vmatprep.subr.mxu0 0.0
        %1186 = vmatpush1.msra.mxu0 0.0
        %1187 = vmatprep.subr.mxu0 0.0
        %1188 = vmatpush1.msra.mxu0 0.0
        %1189 = vmatprep.subr.mxu0 0.0
        %1190 = vmatpush1.msra.mxu0 0.0
        %1191 = vmatprep.subr.mxu0 0.0
        %1192 = vmatpush1.msra.mxu0 0.0
        %1193 = vmatprep.mubr.f32.mxu0 0.0
        %1194 = vmatmul.mubr.f32.gmra.mrb[0].mxu0 %v1127
        %v1195 = vpop.f32.mrb[0].mxu0
        %v1196 = vadd.f32 %v1123, %v1195
        %v1197 = vpop.f32.mrb[0].mxu0
        %1198 = vdwg.mxu0
        %1199 = vst [vmem:[%s227] sm:$0xff] %v1196
        %s1200 = sand.u32 %s138, 1
        %s1201 = scalar_lea.sflag [#allocation8], %s1200
        %s1202 = sand.u32 %s138, 1
        %s1203 = smul.addr %s1202, 8
        %s1204 = scalar_lea.vmem [#allocation7], %s1203
        // Predicated region
        $region109: #{taught_cross_attn.1} parent=35 // pred_check
          %p1205 = pneg %p148
        $region110: #{taught_cross_attn.1} parent=35 // pred_check_branch
          %1207 = sbr.rel (%p1205) target = $region112
        $region111: #{taught_cross_attn.1} parent=35 // pred_region
          %s1209 = ssub.s32 128, 128
          %1210 = vsyncadd %s1201, %s1209
          %s1211 = sadd.s32 %s25, %s24
          %s1212 = smul.addr %s1211, 128
          %s1213 = scalar_lea.hbm %s6, %s1212
          %s1215 = sshll.u32 %s1204, 4
          %s1216 = int_to_ptr.vmem [resolvable:$true] %s1215
          %1218 = dma.vmem_to_hbm [thread:$0]  %s1216, 128, %s1213, %s1201
        $region112: #{taught_cross_attn.1} parent=35 // pred_fallthru
          _
      $region36: #{taught_cross_attn.1} parent=5 // pred_fallthru
        _
      %p1219 = scmp.le.s32.totalorder 2, %s15
      // Predicated region
      $region113: #{taught_cross_attn.1} parent=5 // pred_check
        %p1220 = pneg %p1219
      $region114: #{taught_cross_attn.1} parent=5 // pred_check_branch
        %1222 = sbr.rel (%p1220) target = $region116
      $region115: #{taught_cross_attn.1} parent=5 // pred_region
        %s1223 = ssub.s32 %s15, 2
        // Predicated region
        $region117: #{taught_cross_attn.1} parent=115 // pred_check
          %p1224 = pneg %p154
        $region118: #{taught_cross_attn.1} parent=115 // pred_check_branch
          %1226 = sbr.rel (%p1224) target = $region120
        $region119: #{taught_cross_attn.1} parent=115 // pred_region
          %s1227 = sand.u32 %s139, 1
          %s1228 = scalar_lea.sflag [#allocation8], %s1227
          %s1229 = sand.u32 %s139, 1
          %s1230 = smul.addr %s1229, 8
          %s1231 = scalar_lea.vmem [#allocation7], %s1230
          %1232 = dma.done %s1228, 128
        $region120: #{taught_cross_attn.1} parent=115 // pred_fallthru
          _
      $region116: #{taught_cross_attn.1} parent=5 // pred_fallthru
        _
    $region6: #{taught_cross_attn.1} parent=1 // loop_footer
      %s19 = sadd.s32 1, %s15
    $region7: #{taught_cross_attn.1} parent=1 // loop_footer_branch
      %14 = sbr.rel target = $region3
    $region8: #{taught_cross_attn.1} parent=1 // loop_exit
      _
    %1233 = vsyncpa [#allocation8], 1
    %s1234 = scalar_lea.sflag [#allocation8], 1
    %1235 = vsyncpa %s1234, 1
  %1236 = vsyncmov [#allocation6]
  %s1237 = vpop.sfrf %1236
  %p1238 = scmp.eq.s32.totalorder %s1237, 0
  %p1239 = pneg %p1238
  %1241 = shalt.err (%p1239)
  %s1242 = scalar_lea.sflag [#allocation6], 1
  %1243 = vsyncmov %s1242
  %s1244 = vpop.sfrf %1243
  %p1245 = scmp.eq.s32.totalorder %s1244, 0
  %p1246 = pneg %p1245
  %1248 = shalt.err (%p1246)

</llo_original>
